<compile_context>
chip_gen: v7x
topology: tpu7x:2x2x1
jax: 0.10.0
libtpu: 0.0.40
codegen_flags: <defaults>
</compile_context>

<pallas_src>
import math

import numpy as np
import jax
import jax.numpy as jnp
from jax.experimental import pallas as pl
from jax.experimental.pallas import tpu as pltpu

EPS = 1e-5
K = 3
K3 = K * K * K


def _build_forward(n, cin, cout, d1, h1, w1):
    """Build a jitted forward pass for a fixed geometry (two VALID 3x3x3 convs)."""
    assert min(d1, h1, w1) >= 2 * (K - 1) + 1, "need >=5 spatial extent"
    s_hw = h1 * w1                       # lanes per batch block
    L0 = n * s_hw                        # input lane width (batch-major blocks)
    d2, h2, w2 = d1 - K + 1, h1 - K + 1, w1 - K + 1   # after conv1
    d3, h3, w3 = d2 - K + 1, h2 - K + 1, w2 - K + 1   # after conv2
    off_max = (K - 1) * (w1 + 1)         # largest (kh,kw) lane offset
    L1 = L0 - off_max                    # stage-1 working lane width (in-bounds)
    L2 = L1 - off_max                    # stage-2 working lane width
    R1, R2 = d2, d3                      # valid D rows kept after each stage
    inv1 = 1.0 / float(n * d2 * h2 * w2)
    inv2 = 1.0 / float(n * d3 * h3 * w3)

    # Valid-position masks (static geometry) -> numpy constants, tiny VMEM inputs.
    def lane_mask(width, hlim, wlim):
        lane = np.arange(width)
        local = lane % s_hw
        return (((local // w1) < hlim) & ((local % w1) < wlim)).astype(np.float32)

    mask1_c = jnp.asarray(np.tile(lane_mask(L1, h2, w2), (R1, 1)))
    mask2_c = jnp.asarray(np.tile(lane_mask(L2, h3, w3), (R2, 1)))

    def bn_relu(y, mask, inv_cnt, gamma, beta):
        # Training-mode BatchNorm (biased variance) + ReLU.  One-pass stats:
        # the two reductions are independent; affine folded into one FMA;
        # rsqrt runs on the EUP slot.
        ym = y * mask
        mean = jnp.sum(ym, keepdims=True) * inv_cnt          # (1, 1)
        ex2 = jnp.sum(ym * y, keepdims=True) * inv_cnt       # (1, 1) == E[y^2]
        var = ex2 - mean * mean
        scale = gamma * jax.lax.rsqrt(var + EPS)
        shift = beta - mean * scale
        return jnp.maximum(y * scale + shift, 0.0)

    def conv_stage(chans, cin_s, width_out, rows_out, w_ref):
        # 3D conv on the VPU.  chans[ci]: (rows, width) with D on the sublane
        # axis and (batch, h, w) embedded on the lane axis.  Only the 9 (kh,kw)
        # lane alignments are built per input channel (shared by all kd, co);
        # kd becomes 2 sublane-shifted adds per output channel at the end.
        acc = [[None] * K for _ in range(cout)]
        for kh in range(K):
            for kw in range(K):
                off = kh * w1 + kw
                for ci in range(cin_s):
                    win = chans[ci][:, off:off + width_out]   # one lane alignment
                    for co in range(cout):
                        for kd in range(K):
                            wt = w_ref[(((co * cin_s + ci) * K + kd) * K + kh) * K + kw]
                            contrib = win * wt
                            prev = acc[co][kd]
                            acc[co][kd] = contrib if prev is None else prev + contrib
        out = []
        for co in range(cout):
            y = acc[co][0][0:rows_out, :]
            for kd in range(1, K):
                y = y + acc[co][kd][kd:kd + rows_out, :]
            out.append(y)
        return out

    def kernel(x_ref, w1_ref, w2_ref, g_ref, b_ref, m1_ref, m2_ref, o_ref):
        xc = [x_ref[ci] for ci in range(cin)]          # each (d1, L0): 1 vreg / channel

        # ---- stage 1: conv1 -> BN(batch stats) -> ReLU ----
        y1 = conv_stage(xc, cin, L1, R1, w1_ref)
        m1 = m1_ref[...]
        a1 = [bn_relu(y1[co], m1, inv1, g_ref[co], b_ref[co]) for co in range(cout)]

        # ---- stage 2: conv2 -> same BN -> ReLU ----
        # Stage-2 taps only ever read valid stage-1 rows/lanes, so the garbage
        # positions of the embedded grid never contaminate valid outputs.
        y2 = conv_stage(a1, cout, L2, R2, w2_ref)
        m2 = m2_ref[...]
        for co in range(cout):
            o_ref[co] = bn_relu(y2[co], m2, inv2, g_ref[co], b_ref[co])

    fused = pl.pallas_call(
        kernel,
        out_shape=jax.ShapeDtypeStruct((cout, R2, L2), jnp.float32),
        in_specs=[
            pl.BlockSpec(memory_space=pltpu.MemorySpace.VMEM),   # x  (cin, d1, L0)
            pl.BlockSpec(memory_space=pltpu.MemorySpace.SMEM),   # conv1 weights (flat)
            pl.BlockSpec(memory_space=pltpu.MemorySpace.SMEM),   # conv2 weights (flat)
            pl.BlockSpec(memory_space=pltpu.MemorySpace.SMEM),   # BN gamma
            pl.BlockSpec(memory_space=pltpu.MemorySpace.SMEM),   # BN beta
            pl.BlockSpec(memory_space=pltpu.MemorySpace.VMEM),   # mask1 (R1, L1)
            pl.BlockSpec(memory_space=pltpu.MemorySpace.VMEM),   # mask2 (R2, L2)
        ],
        out_specs=pl.BlockSpec(memory_space=pltpu.MemorySpace.VMEM),
    )
    # TODO(synk): for production-sized volumes add a batch/D-slab grid axis with
    # dimension_semantics=("parallel",) and a two-pass BN reduction so v7x's
    # second TensorCore is used, and re-derive tile sizes against its 64 MiB
    # VMEM (32 MiB scoped default) instead of a v5e/v6e 128 MiB tiling; at this
    # toy size a single program is strictly faster.

    @jax.jit
    def forward(x_ncdhw, params):
        # One boundary layout change in: NCDHW -> (channel, D rows, batch*H*W lanes).
        x_cm = jnp.transpose(x_ncdhw, (1, 2, 0, 3, 4)).reshape(cin, d1, L0)
        out = fused(
            x_cm.astype(jnp.float32),
            params["w1"].reshape(-1).astype(jnp.float32),
            params["w2"].reshape(-1).astype(jnp.float32),
            params["bn_w"].astype(jnp.float32),
            params["bn_b"].astype(jnp.float32),
            mask1_c, mask2_c,
        )
        # Un-embed the stage-2 grid and one boundary transpose out (-> NCDHW).
        out = jnp.pad(out, ((0, 0), (0, 0), (0, L0 - L2)))
        out = out.reshape(cout, d3, n, h1, w1)[:, :, :, :h3, :w3]
        return jnp.transpose(out, (2, 0, 1, 3, 4))

    return forward


@jax.jit
def _reference_forward(x_ncdhw, params):
    """Pure-JAX reference (lax conv, WITH conv bias) for the sanity check."""
    dn = ("NCDHW", "OIDHW", "NCDHW")

    def stage(x, w, b, g, beta):
        y = jax.lax.conv_general_dilated(
            x, w, window_strides=(1, 1, 1), padding="VALID",
            dimension_numbers=dn)
        y = y + b[None, :, None, None, None]
        mean = jnp.mean(y, axis=(0, 2, 3, 4), keepdims=True)
        var = jnp.mean(jnp.square(y - mean), axis=(0, 2, 3, 4), keepdims=True)
        yn = (y - mean) * jax.lax.rsqrt(var + EPS)
        return jnp.maximum(yn * g[None, :, None, None, None]
                           + beta[None, :, None, None, None], 0.0)

    v = stage(x_ncdhw, params["w1"], params["b1"], params["bn_w"], params["bn_b"])
    v = stage(v, params["w2"], params["b2"], params["bn_w"], params["bn_b"])
    return v


def init_params(key):
    cin, cout = 2, 2
    fan_in = cin * K3
    bound = 1.0 / math.sqrt(fan_in)
    k1, k2, k3, k4, k5, k6 = jax.random.split(key, 6)
    return {
        "w1": jax.random.uniform(k1, (cout, cin, K, K, K), jnp.float32, -bound, bound),
        "b1": jax.random.uniform(k2, (cout,), jnp.float32, -bound, bound),
        "w2": jax.random.uniform(k3, (cout, cin, K, K, K), jnp.float32, -bound, bound),
        "b2": jax.random.uniform(k4, (cout,), jnp.float32, -bound, bound),
        # PyTorch BatchNorm3d defaults are gamma=1, beta=0; randomized here so
        # the correctness check exercises the folded affine path.
        "bn_w": 1.0 + 0.5 * jax.random.uniform(k5, (cout,), jnp.float32, -1.0, 1.0),
        "bn_b": 0.5 * jax.random.uniform(k6, (cout,), jnp.float32, -1.0, 1.0),
    }


if __name__ == "__main__":
    key = jax.random.PRNGKey(0)
    kp, kx = jax.random.split(key)
    params = init_params(kp)

    # Input needs >= (5,5,5) spatial extent so both valid 3x3x3 convs fit
    # (the module's own example (1,2,3,4,4) cannot pass through two convs).
    N_, CIN_, D_, H_, W_ = 2, 2, 8, 8, 8
    x = jax.random.normal(kx, (N_, CIN_, D_, H_, W_), jnp.float32)  # NCDHW

    forward = _build_forward(N_, CIN_, 2, D_, H_, W_)
    out = jax.block_until_ready(forward(x, params))
    assert out.shape == (N_, 2, 4, 4, 4), out.shape

    ref = jax.block_until_ready(_reference_forward(x, params))
    err = float(jnp.max(jnp.abs(out - ref)))
    assert err < 2e-3, err

    print("KERNEL_OK")
</pallas_src>

<mosaic_0001>
module attributes {stable_mosaic.version = 11 : i64} {
  func.func @kernel(%arg0: memref<2x8x128xf32, #tpu.memory_space<vmem>>, %arg1: memref<108xf32, #tpu.memory_space<smem>>, %arg2: memref<108xf32, #tpu.memory_space<smem>>, %arg3: memref<2xf32, #tpu.memory_space<smem>>, %arg4: memref<2xf32, #tpu.memory_space<smem>>, %arg5: memref<6x110xf32, #tpu.memory_space<vmem>>, %arg6: memref<4x92xf32, #tpu.memory_space<vmem>>, %arg7: memref<2x4x92xf32, #tpu.memory_space<vmem>>) attributes {dimension_semantics = [], scalar_prefetch = 0 : i64, scratch_operands = 0 : i64, tpu.core_type = #tpu.core_type<tc>} {
    %c0 = arith.constant 0 : index
    %c0_0 = arith.constant 0 : index
    %c0_1 = arith.constant 0 : index
    %0 = vector.load %arg0[%c0, %c0_0, %c0_1] : memref<2x8x128xf32, #tpu.memory_space<vmem>>, vector<1x8x128xf32>
    %1 = vector.shape_cast %0 : vector<1x8x128xf32> to vector<8x128xf32>
    %c1 = arith.constant 1 : index
    %c0_2 = arith.constant 0 : index
    %c0_3 = arith.constant 0 : index
    %2 = vector.load %arg0[%c1, %c0_2, %c0_3] : memref<2x8x128xf32, #tpu.memory_space<vmem>>, vector<1x8x128xf32>
    %3 = vector.shape_cast %2 : vector<1x8x128xf32> to vector<8x128xf32>
    %4 = vector.extract_strided_slice %1 {offsets = [0, 0], sizes = [8, 110], strides = [1, 1]} : vector<8x128xf32> to vector<8x110xf32>
    %c0_4 = arith.constant 0 : index
    %5 = memref.load %arg1[%c0_4] : memref<108xf32, #tpu.memory_space<smem>>
    %6 = vector.broadcast %5 : f32 to vector<8x110xf32>
    %7 = arith.mulf %4, %6 : vector<8x110xf32>
    %c9 = arith.constant 9 : index
    %8 = memref.load %arg1[%c9] : memref<108xf32, #tpu.memory_space<smem>>
    %9 = vector.broadcast %8 : f32 to vector<8x110xf32>
    %10 = arith.mulf %4, %9 : vector<8x110xf32>
    %c18 = arith.constant 18 : index
    %11 = memref.load %arg1[%c18] : memref<108xf32, #tpu.memory_space<smem>>
    %12 = vector.broadcast %11 : f32 to vector<8x110xf32>
    %13 = arith.mulf %4, %12 : vector<8x110xf32>
    %c54 = arith.constant 54 : index
    %14 = memref.load %arg1[%c54] : memref<108xf32, #tpu.memory_space<smem>>
    %15 = vector.broadcast %14 : f32 to vector<8x110xf32>
    %16 = arith.mulf %4, %15 : vector<8x110xf32>
    %c63 = arith.constant 63 : index
    %17 = memref.load %arg1[%c63] : memref<108xf32, #tpu.memory_space<smem>>
    %18 = vector.broadcast %17 : f32 to vector<8x110xf32>
    %19 = arith.mulf %4, %18 : vector<8x110xf32>
    %c72 = arith.constant 72 : index
    %20 = memref.load %arg1[%c72] : memref<108xf32, #tpu.memory_space<smem>>
    %21 = vector.broadcast %20 : f32 to vector<8x110xf32>
    %22 = arith.mulf %4, %21 : vector<8x110xf32>
    %23 = vector.extract_strided_slice %3 {offsets = [0, 0], sizes = [8, 110], strides = [1, 1]} : vector<8x128xf32> to vector<8x110xf32>
    %c27 = arith.constant 27 : index
    %24 = memref.load %arg1[%c27] : memref<108xf32, #tpu.memory_space<smem>>
    %25 = vector.broadcast %24 : f32 to vector<8x110xf32>
    %26 = arith.mulf %23, %25 : vector<8x110xf32>
    %27 = arith.addf %7, %26 : vector<8x110xf32>
    %c36 = arith.constant 36 : index
    %28 = memref.load %arg1[%c36] : memref<108xf32, #tpu.memory_space<smem>>
    %29 = vector.broadcast %28 : f32 to vector<8x110xf32>
    %30 = arith.mulf %23, %29 : vector<8x110xf32>
    %31 = arith.addf %10, %30 : vector<8x110xf32>
    %c45 = arith.constant 45 : index
    %32 = memref.load %arg1[%c45] : memref<108xf32, #tpu.memory_space<smem>>
    %33 = vector.broadcast %32 : f32 to vector<8x110xf32>
    %34 = arith.mulf %23, %33 : vector<8x110xf32>
    %35 = arith.addf %13, %34 : vector<8x110xf32>
    %c81 = arith.constant 81 : index
    %36 = memref.load %arg1[%c81] : memref<108xf32, #tpu.memory_space<smem>>
    %37 = vector.broadcast %36 : f32 to vector<8x110xf32>
    %38 = arith.mulf %23, %37 : vector<8x110xf32>
    %39 = arith.addf %16, %38 : vector<8x110xf32>
    %c90 = arith.constant 90 : index
    %40 = memref.load %arg1[%c90] : memref<108xf32, #tpu.memory_space<smem>>
    %41 = vector.broadcast %40 : f32 to vector<8x110xf32>
    %42 = arith.mulf %23, %41 : vector<8x110xf32>
    %43 = arith.addf %19, %42 : vector<8x110xf32>
    %c99 = arith.constant 99 : index
    %44 = memref.load %arg1[%c99] : memref<108xf32, #tpu.memory_space<smem>>
    %45 = vector.broadcast %44 : f32 to vector<8x110xf32>
    %46 = arith.mulf %23, %45 : vector<8x110xf32>
    %47 = arith.addf %22, %46 : vector<8x110xf32>
    %48 = vector.extract_strided_slice %1 {offsets = [0, 1], sizes = [8, 110], strides = [1, 1]} : vector<8x128xf32> to vector<8x110xf32>
    %c1_5 = arith.constant 1 : index
    %49 = memref.load %arg1[%c1_5] : memref<108xf32, #tpu.memory_space<smem>>
    %50 = vector.broadcast %49 : f32 to vector<8x110xf32>
    %51 = arith.mulf %48, %50 : vector<8x110xf32>
    %52 = arith.addf %27, %51 : vector<8x110xf32>
    %c10 = arith.constant 10 : index
    %53 = memref.load %arg1[%c10] : memref<108xf32, #tpu.memory_space<smem>>
    %54 = vector.broadcast %53 : f32 to vector<8x110xf32>
    %55 = arith.mulf %48, %54 : vector<8x110xf32>
    %56 = arith.addf %31, %55 : vector<8x110xf32>
    %c19 = arith.constant 19 : index
    %57 = memref.load %arg1[%c19] : memref<108xf32, #tpu.memory_space<smem>>
    %58 = vector.broadcast %57 : f32 to vector<8x110xf32>
    %59 = arith.mulf %48, %58 : vector<8x110xf32>
    %60 = arith.addf %35, %59 : vector<8x110xf32>
    %c55 = arith.constant 55 : index
    %61 = memref.load %arg1[%c55] : memref<108xf32, #tpu.memory_space<smem>>
    %62 = vector.broadcast %61 : f32 to vector<8x110xf32>
    %63 = arith.mulf %48, %62 : vector<8x110xf32>
    %64 = arith.addf %39, %63 : vector<8x110xf32>
    %c64 = arith.constant 64 : index
    %65 = memref.load %arg1[%c64] : memref<108xf32, #tpu.memory_space<smem>>
    %66 = vector.broadcast %65 : f32 to vector<8x110xf32>
    %67 = arith.mulf %48, %66 : vector<8x110xf32>
    %68 = arith.addf %43, %67 : vector<8x110xf32>
    %c73 = arith.constant 73 : index
    %69 = memref.load %arg1[%c73] : memref<108xf32, #tpu.memory_space<smem>>
    %70 = vector.broadcast %69 : f32 to vector<8x110xf32>
    %71 = arith.mulf %48, %70 : vector<8x110xf32>
    %72 = arith.addf %47, %71 : vector<8x110xf32>
    %73 = vector.extract_strided_slice %3 {offsets = [0, 1], sizes = [8, 110], strides = [1, 1]} : vector<8x128xf32> to vector<8x110xf32>
    %c28 = arith.constant 28 : index
    %74 = memref.load %arg1[%c28] : memref<108xf32, #tpu.memory_space<smem>>
    %75 = vector.broadcast %74 : f32 to vector<8x110xf32>
    %76 = arith.mulf %73, %75 : vector<8x110xf32>
    %77 = arith.addf %52, %76 : vector<8x110xf32>
    %c37 = arith.constant 37 : index
    %78 = memref.load %arg1[%c37] : memref<108xf32, #tpu.memory_space<smem>>
    %79 = vector.broadcast %78 : f32 to vector<8x110xf32>
    %80 = arith.mulf %73, %79 : vector<8x110xf32>
    %81 = arith.addf %56, %80 : vector<8x110xf32>
    %c46 = arith.constant 46 : index
    %82 = memref.load %arg1[%c46] : memref<108xf32, #tpu.memory_space<smem>>
    %83 = vector.broadcast %82 : f32 to vector<8x110xf32>
    %84 = arith.mulf %73, %83 : vector<8x110xf32>
    %85 = arith.addf %60, %84 : vector<8x110xf32>
    %c82 = arith.constant 82 : index
    %86 = memref.load %arg1[%c82] : memref<108xf32, #tpu.memory_space<smem>>
    %87 = vector.broadcast %86 : f32 to vector<8x110xf32>
    %88 = arith.mulf %73, %87 : vector<8x110xf32>
    %89 = arith.addf %64, %88 : vector<8x110xf32>
    %c91 = arith.constant 91 : index
    %90 = memref.load %arg1[%c91] : memref<108xf32, #tpu.memory_space<smem>>
    %91 = vector.broadcast %90 : f32 to vector<8x110xf32>
    %92 = arith.mulf %73, %91 : vector<8x110xf32>
    %93 = arith.addf %68, %92 : vector<8x110xf32>
    %c100 = arith.constant 100 : index
    %94 = memref.load %arg1[%c100] : memref<108xf32, #tpu.memory_space<smem>>
    %95 = vector.broadcast %94 : f32 to vector<8x110xf32>
    %96 = arith.mulf %73, %95 : vector<8x110xf32>
    %97 = arith.addf %72, %96 : vector<8x110xf32>
    %98 = vector.extract_strided_slice %1 {offsets = [0, 2], sizes = [8, 110], strides = [1, 1]} : vector<8x128xf32> to vector<8x110xf32>
    %c2 = arith.constant 2 : index
    %99 = memref.load %arg1[%c2] : memref<108xf32, #tpu.memory_space<smem>>
    %100 = vector.broadcast %99 : f32 to vector<8x110xf32>
    %101 = arith.mulf %98, %100 : vector<8x110xf32>
    %102 = arith.addf %77, %101 : vector<8x110xf32>
    %c11 = arith.constant 11 : index
    %103 = memref.load %arg1[%c11] : memref<108xf32, #tpu.memory_space<smem>>
    %104 = vector.broadcast %103 : f32 to vector<8x110xf32>
    %105 = arith.mulf %98, %104 : vector<8x110xf32>
    %106 = arith.addf %81, %105 : vector<8x110xf32>
    %c20 = arith.constant 20 : index
    %107 = memref.load %arg1[%c20] : memref<108xf32, #tpu.memory_space<smem>>
    %108 = vector.broadcast %107 : f32 to vector<8x110xf32>
    %109 = arith.mulf %98, %108 : vector<8x110xf32>
    %110 = arith.addf %85, %109 : vector<8x110xf32>
    %c56 = arith.constant 56 : index
    %111 = memref.load %arg1[%c56] : memref<108xf32, #tpu.memory_space<smem>>
    %112 = vector.broadcast %111 : f32 to vector<8x110xf32>
    %113 = arith.mulf %98, %112 : vector<8x110xf32>
    %114 = arith.addf %89, %113 : vector<8x110xf32>
    %c65 = arith.constant 65 : index
    %115 = memref.load %arg1[%c65] : memref<108xf32, #tpu.memory_space<smem>>
    %116 = vector.broadcast %115 : f32 to vector<8x110xf32>
    %117 = arith.mulf %98, %116 : vector<8x110xf32>
    %118 = arith.addf %93, %117 : vector<8x110xf32>
    %c74 = arith.constant 74 : index
    %119 = memref.load %arg1[%c74] : memref<108xf32, #tpu.memory_space<smem>>
    %120 = vector.broadcast %119 : f32 to vector<8x110xf32>
    %121 = arith.mulf %98, %120 : vector<8x110xf32>
    %122 = arith.addf %97, %121 : vector<8x110xf32>
    %123 = vector.extract_strided_slice %3 {offsets = [0, 2], sizes = [8, 110], strides = [1, 1]} : vector<8x128xf32> to vector<8x110xf32>
    %c29 = arith.constant 29 : index
    %124 = memref.load %arg1[%c29] : memref<108xf32, #tpu.memory_space<smem>>
    %125 = vector.broadcast %124 : f32 to vector<8x110xf32>
    %126 = arith.mulf %123, %125 : vector<8x110xf32>
    %127 = arith.addf %102, %126 : vector<8x110xf32>
    %c38 = arith.constant 38 : index
    %128 = memref.load %arg1[%c38] : memref<108xf32, #tpu.memory_space<smem>>
    %129 = vector.broadcast %128 : f32 to vector<8x110xf32>
    %130 = arith.mulf %123, %129 : vector<8x110xf32>
    %131 = arith.addf %106, %130 : vector<8x110xf32>
    %c47 = arith.constant 47 : index
    %132 = memref.load %arg1[%c47] : memref<108xf32, #tpu.memory_space<smem>>
    %133 = vector.broadcast %132 : f32 to vector<8x110xf32>
    %134 = arith.mulf %123, %133 : vector<8x110xf32>
    %135 = arith.addf %110, %134 : vector<8x110xf32>
    %c83 = arith.constant 83 : index
    %136 = memref.load %arg1[%c83] : memref<108xf32, #tpu.memory_space<smem>>
    %137 = vector.broadcast %136 : f32 to vector<8x110xf32>
    %138 = arith.mulf %123, %137 : vector<8x110xf32>
    %139 = arith.addf %114, %138 : vector<8x110xf32>
    %c92 = arith.constant 92 : index
    %140 = memref.load %arg1[%c92] : memref<108xf32, #tpu.memory_space<smem>>
    %141 = vector.broadcast %140 : f32 to vector<8x110xf32>
    %142 = arith.mulf %123, %141 : vector<8x110xf32>
    %143 = arith.addf %118, %142 : vector<8x110xf32>
    %c101 = arith.constant 101 : index
    %144 = memref.load %arg1[%c101] : memref<108xf32, #tpu.memory_space<smem>>
    %145 = vector.broadcast %144 : f32 to vector<8x110xf32>
    %146 = arith.mulf %123, %145 : vector<8x110xf32>
    %147 = arith.addf %122, %146 : vector<8x110xf32>
    %148 = vector.extract_strided_slice %1 {offsets = [0, 8], sizes = [8, 110], strides = [1, 1]} : vector<8x128xf32> to vector<8x110xf32>
    %c3 = arith.constant 3 : index
    %149 = memref.load %arg1[%c3] : memref<108xf32, #tpu.memory_space<smem>>
    %150 = vector.broadcast %149 : f32 to vector<8x110xf32>
    %151 = arith.mulf %148, %150 : vector<8x110xf32>
    %152 = arith.addf %127, %151 : vector<8x110xf32>
    %c12 = arith.constant 12 : index
    %153 = memref.load %arg1[%c12] : memref<108xf32, #tpu.memory_space<smem>>
    %154 = vector.broadcast %153 : f32 to vector<8x110xf32>
    %155 = arith.mulf %148, %154 : vector<8x110xf32>
    %156 = arith.addf %131, %155 : vector<8x110xf32>
    %c21 = arith.constant 21 : index
    %157 = memref.load %arg1[%c21] : memref<108xf32, #tpu.memory_space<smem>>
    %158 = vector.broadcast %157 : f32 to vector<8x110xf32>
    %159 = arith.mulf %148, %158 : vector<8x110xf32>
    %160 = arith.addf %135, %159 : vector<8x110xf32>
    %c57 = arith.constant 57 : index
    %161 = memref.load %arg1[%c57] : memref<108xf32, #tpu.memory_space<smem>>
    %162 = vector.broadcast %161 : f32 to vector<8x110xf32>
    %163 = arith.mulf %148, %162 : vector<8x110xf32>
    %164 = arith.addf %139, %163 : vector<8x110xf32>
    %c66 = arith.constant 66 : index
    %165 = memref.load %arg1[%c66] : memref<108xf32, #tpu.memory_space<smem>>
    %166 = vector.broadcast %165 : f32 to vector<8x110xf32>
    %167 = arith.mulf %148, %166 : vector<8x110xf32>
    %168 = arith.addf %143, %167 : vector<8x110xf32>
    %c75 = arith.constant 75 : index
    %169 = memref.load %arg1[%c75] : memref<108xf32, #tpu.memory_space<smem>>
    %170 = vector.broadcast %169 : f32 to vector<8x110xf32>
    %171 = arith.mulf %148, %170 : vector<8x110xf32>
    %172 = arith.addf %147, %171 : vector<8x110xf32>
    %173 = vector.extract_strided_slice %3 {offsets = [0, 8], sizes = [8, 110], strides = [1, 1]} : vector<8x128xf32> to vector<8x110xf32>
    %c30 = arith.constant 30 : index
    %174 = memref.load %arg1[%c30] : memref<108xf32, #tpu.memory_space<smem>>
    %175 = vector.broadcast %174 : f32 to vector<8x110xf32>
    %176 = arith.mulf %173, %175 : vector<8x110xf32>
    %177 = arith.addf %152, %176 : vector<8x110xf32>
    %c39 = arith.constant 39 : index
    %178 = memref.load %arg1[%c39] : memref<108xf32, #tpu.memory_space<smem>>
    %179 = vector.broadcast %178 : f32 to vector<8x110xf32>
    %180 = arith.mulf %173, %179 : vector<8x110xf32>
    %181 = arith.addf %156, %180 : vector<8x110xf32>
    %c48 = arith.constant 48 : index
    %182 = memref.load %arg1[%c48] : memref<108xf32, #tpu.memory_space<smem>>
    %183 = vector.broadcast %182 : f32 to vector<8x110xf32>
    %184 = arith.mulf %173, %183 : vector<8x110xf32>
    %185 = arith.addf %160, %184 : vector<8x110xf32>
    %c84 = arith.constant 84 : index
    %186 = memref.load %arg1[%c84] : memref<108xf32, #tpu.memory_space<smem>>
    %187 = vector.broadcast %186 : f32 to vector<8x110xf32>
    %188 = arith.mulf %173, %187 : vector<8x110xf32>
    %189 = arith.addf %164, %188 : vector<8x110xf32>
    %c93 = arith.constant 93 : index
    %190 = memref.load %arg1[%c93] : memref<108xf32, #tpu.memory_space<smem>>
    %191 = vector.broadcast %190 : f32 to vector<8x110xf32>
    %192 = arith.mulf %173, %191 : vector<8x110xf32>
    %193 = arith.addf %168, %192 : vector<8x110xf32>
    %c102 = arith.constant 102 : index
    %194 = memref.load %arg1[%c102] : memref<108xf32, #tpu.memory_space<smem>>
    %195 = vector.broadcast %194 : f32 to vector<8x110xf32>
    %196 = arith.mulf %173, %195 : vector<8x110xf32>
    %197 = arith.addf %172, %196 : vector<8x110xf32>
    %198 = vector.extract_strided_slice %1 {offsets = [0, 9], sizes = [8, 110], strides = [1, 1]} : vector<8x128xf32> to vector<8x110xf32>
    %c4 = arith.constant 4 : index
    %199 = memref.load %arg1[%c4] : memref<108xf32, #tpu.memory_space<smem>>
    %200 = vector.broadcast %199 : f32 to vector<8x110xf32>
    %201 = arith.mulf %198, %200 : vector<8x110xf32>
    %202 = arith.addf %177, %201 : vector<8x110xf32>
    %c13 = arith.constant 13 : index
    %203 = memref.load %arg1[%c13] : memref<108xf32, #tpu.memory_space<smem>>
    %204 = vector.broadcast %203 : f32 to vector<8x110xf32>
    %205 = arith.mulf %198, %204 : vector<8x110xf32>
    %206 = arith.addf %181, %205 : vector<8x110xf32>
    %c22 = arith.constant 22 : index
    %207 = memref.load %arg1[%c22] : memref<108xf32, #tpu.memory_space<smem>>
    %208 = vector.broadcast %207 : f32 to vector<8x110xf32>
    %209 = arith.mulf %198, %208 : vector<8x110xf32>
    %210 = arith.addf %185, %209 : vector<8x110xf32>
    %c58 = arith.constant 58 : index
    %211 = memref.load %arg1[%c58] : memref<108xf32, #tpu.memory_space<smem>>
    %212 = vector.broadcast %211 : f32 to vector<8x110xf32>
    %213 = arith.mulf %198, %212 : vector<8x110xf32>
    %214 = arith.addf %189, %213 : vector<8x110xf32>
    %c67 = arith.constant 67 : index
    %215 = memref.load %arg1[%c67] : memref<108xf32, #tpu.memory_space<smem>>
    %216 = vector.broadcast %215 : f32 to vector<8x110xf32>
    %217 = arith.mulf %198, %216 : vector<8x110xf32>
    %218 = arith.addf %193, %217 : vector<8x110xf32>
    %c76 = arith.constant 76 : index
    %219 = memref.load %arg1[%c76] : memref<108xf32, #tpu.memory_space<smem>>
    %220 = vector.broadcast %219 : f32 to vector<8x110xf32>
    %221 = arith.mulf %198, %220 : vector<8x110xf32>
    %222 = arith.addf %197, %221 : vector<8x110xf32>
    %223 = vector.extract_strided_slice %3 {offsets = [0, 9], sizes = [8, 110], strides = [1, 1]} : vector<8x128xf32> to vector<8x110xf32>
    %c31 = arith.constant 31 : index
    %224 = memref.load %arg1[%c31] : memref<108xf32, #tpu.memory_space<smem>>
    %225 = vector.broadcast %224 : f32 to vector<8x110xf32>
    %226 = arith.mulf %223, %225 : vector<8x110xf32>
    %227 = arith.addf %202, %226 : vector<8x110xf32>
    %c40 = arith.constant 40 : index
    %228 = memref.load %arg1[%c40] : memref<108xf32, #tpu.memory_space<smem>>
    %229 = vector.broadcast %228 : f32 to vector<8x110xf32>
    %230 = arith.mulf %223, %229 : vector<8x110xf32>
    %231 = arith.addf %206, %230 : vector<8x110xf32>
    %c49 = arith.constant 49 : index
    %232 = memref.load %arg1[%c49] : memref<108xf32, #tpu.memory_space<smem>>
    %233 = vector.broadcast %232 : f32 to vector<8x110xf32>
    %234 = arith.mulf %223, %233 : vector<8x110xf32>
    %235 = arith.addf %210, %234 : vector<8x110xf32>
    %c85 = arith.constant 85 : index
    %236 = memref.load %arg1[%c85] : memref<108xf32, #tpu.memory_space<smem>>
    %237 = vector.broadcast %236 : f32 to vector<8x110xf32>
    %238 = arith.mulf %223, %237 : vector<8x110xf32>
    %239 = arith.addf %214, %238 : vector<8x110xf32>
    %c94 = arith.constant 94 : index
    %240 = memref.load %arg1[%c94] : memref<108xf32, #tpu.memory_space<smem>>
    %241 = vector.broadcast %240 : f32 to vector<8x110xf32>
    %242 = arith.mulf %223, %241 : vector<8x110xf32>
    %243 = arith.addf %218, %242 : vector<8x110xf32>
    %c103 = arith.constant 103 : index
    %244 = memref.load %arg1[%c103] : memref<108xf32, #tpu.memory_space<smem>>
    %245 = vector.broadcast %244 : f32 to vector<8x110xf32>
    %246 = arith.mulf %223, %245 : vector<8x110xf32>
    %247 = arith.addf %222, %246 : vector<8x110xf32>
    %248 = vector.extract_strided_slice %1 {offsets = [0, 10], sizes = [8, 110], strides = [1, 1]} : vector<8x128xf32> to vector<8x110xf32>
    %c5 = arith.constant 5 : index
    %249 = memref.load %arg1[%c5] : memref<108xf32, #tpu.memory_space<smem>>
    %250 = vector.broadcast %249 : f32 to vector<8x110xf32>
    %251 = arith.mulf %248, %250 : vector<8x110xf32>
    %252 = arith.addf %227, %251 : vector<8x110xf32>
    %c14 = arith.constant 14 : index
    %253 = memref.load %arg1[%c14] : memref<108xf32, #tpu.memory_space<smem>>
    %254 = vector.broadcast %253 : f32 to vector<8x110xf32>
    %255 = arith.mulf %248, %254 : vector<8x110xf32>
    %256 = arith.addf %231, %255 : vector<8x110xf32>
    %c23 = arith.constant 23 : index
    %257 = memref.load %arg1[%c23] : memref<108xf32, #tpu.memory_space<smem>>
    %258 = vector.broadcast %257 : f32 to vector<8x110xf32>
    %259 = arith.mulf %248, %258 : vector<8x110xf32>
    %260 = arith.addf %235, %259 : vector<8x110xf32>
    %c59 = arith.constant 59 : index
    %261 = memref.load %arg1[%c59] : memref<108xf32, #tpu.memory_space<smem>>
    %262 = vector.broadcast %261 : f32 to vector<8x110xf32>
    %263 = arith.mulf %248, %262 : vector<8x110xf32>
    %264 = arith.addf %239, %263 : vector<8x110xf32>
    %c68 = arith.constant 68 : index
    %265 = memref.load %arg1[%c68] : memref<108xf32, #tpu.memory_space<smem>>
    %266 = vector.broadcast %265 : f32 to vector<8x110xf32>
    %267 = arith.mulf %248, %266 : vector<8x110xf32>
    %268 = arith.addf %243, %267 : vector<8x110xf32>
    %c77 = arith.constant 77 : index
    %269 = memref.load %arg1[%c77] : memref<108xf32, #tpu.memory_space<smem>>
    %270 = vector.broadcast %269 : f32 to vector<8x110xf32>
    %271 = arith.mulf %248, %270 : vector<8x110xf32>
    %272 = arith.addf %247, %271 : vector<8x110xf32>
    %273 = vector.extract_strided_slice %3 {offsets = [0, 10], sizes = [8, 110], strides = [1, 1]} : vector<8x128xf32> to vector<8x110xf32>
    %c32 = arith.constant 32 : index
    %274 = memref.load %arg1[%c32] : memref<108xf32, #tpu.memory_space<smem>>
    %275 = vector.broadcast %274 : f32 to vector<8x110xf32>
    %276 = arith.mulf %273, %275 : vector<8x110xf32>
    %277 = arith.addf %252, %276 : vector<8x110xf32>
    %c41 = arith.constant 41 : index
    %278 = memref.load %arg1[%c41] : memref<108xf32, #tpu.memory_space<smem>>
    %279 = vector.broadcast %278 : f32 to vector<8x110xf32>
    %280 = arith.mulf %273, %279 : vector<8x110xf32>
    %281 = arith.addf %256, %280 : vector<8x110xf32>
    %c50 = arith.constant 50 : index
    %282 = memref.load %arg1[%c50] : memref<108xf32, #tpu.memory_space<smem>>
    %283 = vector.broadcast %282 : f32 to vector<8x110xf32>
    %284 = arith.mulf %273, %283 : vector<8x110xf32>
    %285 = arith.addf %260, %284 : vector<8x110xf32>
    %c86 = arith.constant 86 : index
    %286 = memref.load %arg1[%c86] : memref<108xf32, #tpu.memory_space<smem>>
    %287 = vector.broadcast %286 : f32 to vector<8x110xf32>
    %288 = arith.mulf %273, %287 : vector<8x110xf32>
    %289 = arith.addf %264, %288 : vector<8x110xf32>
    %c95 = arith.constant 95 : index
    %290 = memref.load %arg1[%c95] : memref<108xf32, #tpu.memory_space<smem>>
    %291 = vector.broadcast %290 : f32 to vector<8x110xf32>
    %292 = arith.mulf %273, %291 : vector<8x110xf32>
    %293 = arith.addf %268, %292 : vector<8x110xf32>
    %c104 = arith.constant 104 : index
    %294 = memref.load %arg1[%c104] : memref<108xf32, #tpu.memory_space<smem>>
    %295 = vector.broadcast %294 : f32 to vector<8x110xf32>
    %296 = arith.mulf %273, %295 : vector<8x110xf32>
    %297 = arith.addf %272, %296 : vector<8x110xf32>
    %298 = vector.extract_strided_slice %1 {offsets = [0, 16], sizes = [8, 110], strides = [1, 1]} : vector<8x128xf32> to vector<8x110xf32>
    %c6 = arith.constant 6 : index
    %299 = memref.load %arg1[%c6] : memref<108xf32, #tpu.memory_space<smem>>
    %300 = vector.broadcast %299 : f32 to vector<8x110xf32>
    %301 = arith.mulf %298, %300 : vector<8x110xf32>
    %302 = arith.addf %277, %301 : vector<8x110xf32>
    %c15 = arith.constant 15 : index
    %303 = memref.load %arg1[%c15] : memref<108xf32, #tpu.memory_space<smem>>
    %304 = vector.broadcast %303 : f32 to vector<8x110xf32>
    %305 = arith.mulf %298, %304 : vector<8x110xf32>
    %306 = arith.addf %281, %305 : vector<8x110xf32>
    %c24 = arith.constant 24 : index
    %307 = memref.load %arg1[%c24] : memref<108xf32, #tpu.memory_space<smem>>
    %308 = vector.broadcast %307 : f32 to vector<8x110xf32>
    %309 = arith.mulf %298, %308 : vector<8x110xf32>
    %310 = arith.addf %285, %309 : vector<8x110xf32>
    %c60 = arith.constant 60 : index
    %311 = memref.load %arg1[%c60] : memref<108xf32, #tpu.memory_space<smem>>
    %312 = vector.broadcast %311 : f32 to vector<8x110xf32>
    %313 = arith.mulf %298, %312 : vector<8x110xf32>
    %314 = arith.addf %289, %313 : vector<8x110xf32>
    %c69 = arith.constant 69 : index
    %315 = memref.load %arg1[%c69] : memref<108xf32, #tpu.memory_space<smem>>
    %316 = vector.broadcast %315 : f32 to vector<8x110xf32>
    %317 = arith.mulf %298, %316 : vector<8x110xf32>
    %318 = arith.addf %293, %317 : vector<8x110xf32>
    %c78 = arith.constant 78 : index
    %319 = memref.load %arg1[%c78] : memref<108xf32, #tpu.memory_space<smem>>
    %320 = vector.broadcast %319 : f32 to vector<8x110xf32>
    %321 = arith.mulf %298, %320 : vector<8x110xf32>
    %322 = arith.addf %297, %321 : vector<8x110xf32>
    %323 = vector.extract_strided_slice %3 {offsets = [0, 16], sizes = [8, 110], strides = [1, 1]} : vector<8x128xf32> to vector<8x110xf32>
    %c33 = arith.constant 33 : index
    %324 = memref.load %arg1[%c33] : memref<108xf32, #tpu.memory_space<smem>>
    %325 = vector.broadcast %324 : f32 to vector<8x110xf32>
    %326 = arith.mulf %323, %325 : vector<8x110xf32>
    %327 = arith.addf %302, %326 : vector<8x110xf32>
    %c42 = arith.constant 42 : index
    %328 = memref.load %arg1[%c42] : memref<108xf32, #tpu.memory_space<smem>>
    %329 = vector.broadcast %328 : f32 to vector<8x110xf32>
    %330 = arith.mulf %323, %329 : vector<8x110xf32>
    %331 = arith.addf %306, %330 : vector<8x110xf32>
    %c51 = arith.constant 51 : index
    %332 = memref.load %arg1[%c51] : memref<108xf32, #tpu.memory_space<smem>>
    %333 = vector.broadcast %332 : f32 to vector<8x110xf32>
    %334 = arith.mulf %323, %333 : vector<8x110xf32>
    %335 = arith.addf %310, %334 : vector<8x110xf32>
    %c87 = arith.constant 87 : index
    %336 = memref.load %arg1[%c87] : memref<108xf32, #tpu.memory_space<smem>>
    %337 = vector.broadcast %336 : f32 to vector<8x110xf32>
    %338 = arith.mulf %323, %337 : vector<8x110xf32>
    %339 = arith.addf %314, %338 : vector<8x110xf32>
    %c96 = arith.constant 96 : index
    %340 = memref.load %arg1[%c96] : memref<108xf32, #tpu.memory_space<smem>>
    %341 = vector.broadcast %340 : f32 to vector<8x110xf32>
    %342 = arith.mulf %323, %341 : vector<8x110xf32>
    %343 = arith.addf %318, %342 : vector<8x110xf32>
    %c105 = arith.constant 105 : index
    %344 = memref.load %arg1[%c105] : memref<108xf32, #tpu.memory_space<smem>>
    %345 = vector.broadcast %344 : f32 to vector<8x110xf32>
    %346 = arith.mulf %323, %345 : vector<8x110xf32>
    %347 = arith.addf %322, %346 : vector<8x110xf32>
    %348 = vector.extract_strided_slice %1 {offsets = [0, 17], sizes = [8, 110], strides = [1, 1]} : vector<8x128xf32> to vector<8x110xf32>
    %c7 = arith.constant 7 : index
    %349 = memref.load %arg1[%c7] : memref<108xf32, #tpu.memory_space<smem>>
    %350 = vector.broadcast %349 : f32 to vector<8x110xf32>
    %351 = arith.mulf %348, %350 : vector<8x110xf32>
    %352 = arith.addf %327, %351 : vector<8x110xf32>
    %c16 = arith.constant 16 : index
    %353 = memref.load %arg1[%c16] : memref<108xf32, #tpu.memory_space<smem>>
    %354 = vector.broadcast %353 : f32 to vector<8x110xf32>
    %355 = arith.mulf %348, %354 : vector<8x110xf32>
    %356 = arith.addf %331, %355 : vector<8x110xf32>
    %c25 = arith.constant 25 : index
    %357 = memref.load %arg1[%c25] : memref<108xf32, #tpu.memory_space<smem>>
    %358 = vector.broadcast %357 : f32 to vector<8x110xf32>
    %359 = arith.mulf %348, %358 : vector<8x110xf32>
    %360 = arith.addf %335, %359 : vector<8x110xf32>
    %c61 = arith.constant 61 : index
    %361 = memref.load %arg1[%c61] : memref<108xf32, #tpu.memory_space<smem>>
    %362 = vector.broadcast %361 : f32 to vector<8x110xf32>
    %363 = arith.mulf %348, %362 : vector<8x110xf32>
    %364 = arith.addf %339, %363 : vector<8x110xf32>
    %c70 = arith.constant 70 : index
    %365 = memref.load %arg1[%c70] : memref<108xf32, #tpu.memory_space<smem>>
    %366 = vector.broadcast %365 : f32 to vector<8x110xf32>
    %367 = arith.mulf %348, %366 : vector<8x110xf32>
    %368 = arith.addf %343, %367 : vector<8x110xf32>
    %c79 = arith.constant 79 : index
    %369 = memref.load %arg1[%c79] : memref<108xf32, #tpu.memory_space<smem>>
    %370 = vector.broadcast %369 : f32 to vector<8x110xf32>
    %371 = arith.mulf %348, %370 : vector<8x110xf32>
    %372 = arith.addf %347, %371 : vector<8x110xf32>
    %373 = vector.extract_strided_slice %3 {offsets = [0, 17], sizes = [8, 110], strides = [1, 1]} : vector<8x128xf32> to vector<8x110xf32>
    %c34 = arith.constant 34 : index
    %374 = memref.load %arg1[%c34] : memref<108xf32, #tpu.memory_space<smem>>
    %375 = vector.broadcast %374 : f32 to vector<8x110xf32>
    %376 = arith.mulf %373, %375 : vector<8x110xf32>
    %377 = arith.addf %352, %376 : vector<8x110xf32>
    %c43 = arith.constant 43 : index
    %378 = memref.load %arg1[%c43] : memref<108xf32, #tpu.memory_space<smem>>
    %379 = vector.broadcast %378 : f32 to vector<8x110xf32>
    %380 = arith.mulf %373, %379 : vector<8x110xf32>
    %381 = arith.addf %356, %380 : vector<8x110xf32>
    %c52 = arith.constant 52 : index
    %382 = memref.load %arg1[%c52] : memref<108xf32, #tpu.memory_space<smem>>
    %383 = vector.broadcast %382 : f32 to vector<8x110xf32>
    %384 = arith.mulf %373, %383 : vector<8x110xf32>
    %385 = arith.addf %360, %384 : vector<8x110xf32>
    %c88 = arith.constant 88 : index
    %386 = memref.load %arg1[%c88] : memref<108xf32, #tpu.memory_space<smem>>
    %387 = vector.broadcast %386 : f32 to vector<8x110xf32>
    %388 = arith.mulf %373, %387 : vector<8x110xf32>
    %389 = arith.addf %364, %388 : vector<8x110xf32>
    %c97 = arith.constant 97 : index
    %390 = memref.load %arg1[%c97] : memref<108xf32, #tpu.memory_space<smem>>
    %391 = vector.broadcast %390 : f32 to vector<8x110xf32>
    %392 = arith.mulf %373, %391 : vector<8x110xf32>
    %393 = arith.addf %368, %392 : vector<8x110xf32>
    %c106 = arith.constant 106 : index
    %394 = memref.load %arg1[%c106] : memref<108xf32, #tpu.memory_space<smem>>
    %395 = vector.broadcast %394 : f32 to vector<8x110xf32>
    %396 = arith.mulf %373, %395 : vector<8x110xf32>
    %397 = arith.addf %372, %396 : vector<8x110xf32>
    %398 = vector.extract_strided_slice %1 {offsets = [0, 18], sizes = [8, 110], strides = [1, 1]} : vector<8x128xf32> to vector<8x110xf32>
    %c8 = arith.constant 8 : index
    %399 = memref.load %arg1[%c8] : memref<108xf32, #tpu.memory_space<smem>>
    %400 = vector.broadcast %399 : f32 to vector<8x110xf32>
    %401 = arith.mulf %398, %400 : vector<8x110xf32>
    %402 = arith.addf %377, %401 : vector<8x110xf32>
    %c17 = arith.constant 17 : index
    %403 = memref.load %arg1[%c17] : memref<108xf32, #tpu.memory_space<smem>>
    %404 = vector.broadcast %403 : f32 to vector<8x110xf32>
    %405 = arith.mulf %398, %404 : vector<8x110xf32>
    %406 = arith.addf %381, %405 : vector<8x110xf32>
    %c26 = arith.constant 26 : index
    %407 = memref.load %arg1[%c26] : memref<108xf32, #tpu.memory_space<smem>>
    %408 = vector.broadcast %407 : f32 to vector<8x110xf32>
    %409 = arith.mulf %398, %408 : vector<8x110xf32>
    %410 = arith.addf %385, %409 : vector<8x110xf32>
    %c62 = arith.constant 62 : index
    %411 = memref.load %arg1[%c62] : memref<108xf32, #tpu.memory_space<smem>>
    %412 = vector.broadcast %411 : f32 to vector<8x110xf32>
    %413 = arith.mulf %398, %412 : vector<8x110xf32>
    %414 = arith.addf %389, %413 : vector<8x110xf32>
    %c71 = arith.constant 71 : index
    %415 = memref.load %arg1[%c71] : memref<108xf32, #tpu.memory_space<smem>>
    %416 = vector.broadcast %415 : f32 to vector<8x110xf32>
    %417 = arith.mulf %398, %416 : vector<8x110xf32>
    %418 = arith.addf %393, %417 : vector<8x110xf32>
    %c80 = arith.constant 80 : index
    %419 = memref.load %arg1[%c80] : memref<108xf32, #tpu.memory_space<smem>>
    %420 = vector.broadcast %419 : f32 to vector<8x110xf32>
    %421 = arith.mulf %398, %420 : vector<8x110xf32>
    %422 = arith.addf %397, %421 : vector<8x110xf32>
    %423 = vector.extract_strided_slice %3 {offsets = [0, 18], sizes = [8, 110], strides = [1, 1]} : vector<8x128xf32> to vector<8x110xf32>
    %c35 = arith.constant 35 : index
    %424 = memref.load %arg1[%c35] : memref<108xf32, #tpu.memory_space<smem>>
    %425 = vector.broadcast %424 : f32 to vector<8x110xf32>
    %426 = arith.mulf %423, %425 : vector<8x110xf32>
    %427 = arith.addf %402, %426 : vector<8x110xf32>
    %c44 = arith.constant 44 : index
    %428 = memref.load %arg1[%c44] : memref<108xf32, #tpu.memory_space<smem>>
    %429 = vector.broadcast %428 : f32 to vector<8x110xf32>
    %430 = arith.mulf %423, %429 : vector<8x110xf32>
    %431 = arith.addf %406, %430 : vector<8x110xf32>
    %c53 = arith.constant 53 : index
    %432 = memref.load %arg1[%c53] : memref<108xf32, #tpu.memory_space<smem>>
    %433 = vector.broadcast %432 : f32 to vector<8x110xf32>
    %434 = arith.mulf %423, %433 : vector<8x110xf32>
    %435 = arith.addf %410, %434 : vector<8x110xf32>
    %c89 = arith.constant 89 : index
    %436 = memref.load %arg1[%c89] : memref<108xf32, #tpu.memory_space<smem>>
    %437 = vector.broadcast %436 : f32 to vector<8x110xf32>
    %438 = arith.mulf %423, %437 : vector<8x110xf32>
    %439 = arith.addf %414, %438 : vector<8x110xf32>
    %c98 = arith.constant 98 : index
    %440 = memref.load %arg1[%c98] : memref<108xf32, #tpu.memory_space<smem>>
    %441 = vector.broadcast %440 : f32 to vector<8x110xf32>
    %442 = arith.mulf %423, %441 : vector<8x110xf32>
    %443 = arith.addf %418, %442 : vector<8x110xf32>
    %c107 = arith.constant 107 : index
    %444 = memref.load %arg1[%c107] : memref<108xf32, #tpu.memory_space<smem>>
    %445 = vector.broadcast %444 : f32 to vector<8x110xf32>
    %446 = arith.mulf %423, %445 : vector<8x110xf32>
    %447 = arith.addf %422, %446 : vector<8x110xf32>
    %448 = vector.extract_strided_slice %427 {offsets = [0, 0], sizes = [6, 110], strides = [1, 1]} : vector<8x110xf32> to vector<6x110xf32>
    %449 = vector.extract_strided_slice %431 {offsets = [1, 0], sizes = [6, 110], strides = [1, 1]} : vector<8x110xf32> to vector<6x110xf32>
    %450 = arith.addf %448, %449 : vector<6x110xf32>
    %451 = vector.extract_strided_slice %435 {offsets = [2, 0], sizes = [6, 110], strides = [1, 1]} : vector<8x110xf32> to vector<6x110xf32>
    %452 = arith.addf %450, %451 : vector<6x110xf32>
    %453 = vector.extract_strided_slice %439 {offsets = [0, 0], sizes = [6, 110], strides = [1, 1]} : vector<8x110xf32> to vector<6x110xf32>
    %454 = vector.extract_strided_slice %443 {offsets = [1, 0], sizes = [6, 110], strides = [1, 1]} : vector<8x110xf32> to vector<6x110xf32>
    %455 = arith.addf %453, %454 : vector<6x110xf32>
    %456 = vector.extract_strided_slice %447 {offsets = [2, 0], sizes = [6, 110], strides = [1, 1]} : vector<8x110xf32> to vector<6x110xf32>
    %457 = arith.addf %455, %456 : vector<6x110xf32>
    %c0_6 = arith.constant 0 : index
    %c0_7 = arith.constant 0 : index
    %458 = vector.load %arg5[%c0_6, %c0_7] : memref<6x110xf32, #tpu.memory_space<vmem>>, vector<6x110xf32>
    %c0_8 = arith.constant 0 : index
    %459 = memref.load %arg3[%c0_8] : memref<2xf32, #tpu.memory_space<smem>>
    %c0_9 = arith.constant 0 : index
    %460 = memref.load %arg4[%c0_9] : memref<2xf32, #tpu.memory_space<smem>>
    %461 = arith.mulf %452, %458 : vector<6x110xf32>
    %462 = vector.shape_cast %461 : vector<6x110xf32> to vector<1x6x110xf32>
    %cst = arith.constant dense<0.000000e+00> : vector<1xf32>
    %463 = vector.multi_reduction <add>, %462, %cst [1, 2] : vector<1x6x110xf32> to vector<1xf32>
    %464 = vector.shape_cast %463 : vector<1xf32> to vector<1x1x1xf32>
    %465 = vector.extract %464[0, 0, 0] : f32 from vector<1x1x1xf32>
    %466 = vector.broadcast %465 : f32 to vector<1x1xf32>
    %cst_10 = arith.constant 0.00231481483 : f32
    %467 = vector.broadcast %cst_10 : f32 to vector<1x1xf32>
    %468 = arith.mulf %466, %467 : vector<1x1xf32>
    %469 = arith.mulf %461, %452 : vector<6x110xf32>
    %470 = vector.shape_cast %469 : vector<6x110xf32> to vector<1x6x110xf32>
    %cst_11 = arith.constant dense<0.000000e+00> : vector<1xf32>
    %471 = vector.multi_reduction <add>, %470, %cst_11 [1, 2] : vector<1x6x110xf32> to vector<1xf32>
    %472 = vector.shape_cast %471 : vector<1xf32> to vector<1x1x1xf32>
    %473 = vector.extract %472[0, 0, 0] : f32 from vector<1x1x1xf32>
    %474 = vector.broadcast %473 : f32 to vector<1x1xf32>
    %cst_12 = arith.constant 0.00231481483 : f32
    %475 = vector.broadcast %cst_12 : f32 to vector<1x1xf32>
    %476 = arith.mulf %474, %475 : vector<1x1xf32>
    %477 = arith.mulf %468, %468 : vector<1x1xf32>
    %478 = arith.subf %476, %477 : vector<1x1xf32>
    %cst_13 = arith.constant 9.99999974E-6 : f32
    %479 = vector.broadcast %cst_13 : f32 to vector<1x1xf32>
    %480 = arith.addf %478, %479 : vector<1x1xf32>
    %481 = math.rsqrt %480 : vector<1x1xf32>
    %482 = vector.broadcast %459 : f32 to vector<1x1xf32>
    %483 = arith.mulf %482, %481 : vector<1x1xf32>
    %484 = arith.mulf %468, %483 : vector<1x1xf32>
    %485 = vector.broadcast %460 : f32 to vector<1x1xf32>
    %486 = arith.subf %485, %484 : vector<1x1xf32>
    %487 = vector.broadcast %483 : vector<1x1xf32> to vector<6x110xf32>
    %488 = arith.mulf %452, %487 : vector<6x110xf32>
    %489 = vector.broadcast %486 : vector<1x1xf32> to vector<6x110xf32>
    %490 = arith.addf %488, %489 : vector<6x110xf32>
    %cst_14 = arith.constant 0.000000e+00 : f32
    %491 = vector.broadcast %cst_14 : f32 to vector<6x110xf32>
    %492 = arith.maximumf %490, %491 : vector<6x110xf32>
    %c1_15 = arith.constant 1 : index
    %493 = memref.load %arg3[%c1_15] : memref<2xf32, #tpu.memory_space<smem>>
    %c1_16 = arith.constant 1 : index
    %494 = memref.load %arg4[%c1_16] : memref<2xf32, #tpu.memory_space<smem>>
    %495 = arith.mulf %457, %458 : vector<6x110xf32>
    %496 = vector.shape_cast %495 : vector<6x110xf32> to vector<1x6x110xf32>
    %cst_17 = arith.constant dense<0.000000e+00> : vector<1xf32>
    %497 = vector.multi_reduction <add>, %496, %cst_17 [1, 2] : vector<1x6x110xf32> to vector<1xf32>
    %498 = vector.shape_cast %497 : vector<1xf32> to vector<1x1x1xf32>
    %499 = vector.extract %498[0, 0, 0] : f32 from vector<1x1x1xf32>
    %500 = vector.broadcast %499 : f32 to vector<1x1xf32>
    %cst_18 = arith.constant 0.00231481483 : f32
    %501 = vector.broadcast %cst_18 : f32 to vector<1x1xf32>
    %502 = arith.mulf %500, %501 : vector<1x1xf32>
    %503 = arith.mulf %495, %457 : vector<6x110xf32>
    %504 = vector.shape_cast %503 : vector<6x110xf32> to vector<1x6x110xf32>
    %cst_19 = arith.constant dense<0.000000e+00> : vector<1xf32>
    %505 = vector.multi_reduction <add>, %504, %cst_19 [1, 2] : vector<1x6x110xf32> to vector<1xf32>
    %506 = vector.shape_cast %505 : vector<1xf32> to vector<1x1x1xf32>
    %507 = vector.extract %506[0, 0, 0] : f32 from vector<1x1x1xf32>
    %508 = vector.broadcast %507 : f32 to vector<1x1xf32>
    %cst_20 = arith.constant 0.00231481483 : f32
    %509 = vector.broadcast %cst_20 : f32 to vector<1x1xf32>
    %510 = arith.mulf %508, %509 : vector<1x1xf32>
    %511 = arith.mulf %502, %502 : vector<1x1xf32>
    %512 = arith.subf %510, %511 : vector<1x1xf32>
    %cst_21 = arith.constant 9.99999974E-6 : f32
    %513 = vector.broadcast %cst_21 : f32 to vector<1x1xf32>
    %514 = arith.addf %512, %513 : vector<1x1xf32>
    %515 = math.rsqrt %514 : vector<1x1xf32>
    %516 = vector.broadcast %493 : f32 to vector<1x1xf32>
    %517 = arith.mulf %516, %515 : vector<1x1xf32>
    %518 = arith.mulf %502, %517 : vector<1x1xf32>
    %519 = vector.broadcast %494 : f32 to vector<1x1xf32>
    %520 = arith.subf %519, %518 : vector<1x1xf32>
    %521 = vector.broadcast %517 : vector<1x1xf32> to vector<6x110xf32>
    %522 = arith.mulf %457, %521 : vector<6x110xf32>
    %523 = vector.broadcast %520 : vector<1x1xf32> to vector<6x110xf32>
    %524 = arith.addf %522, %523 : vector<6x110xf32>
    %cst_22 = arith.constant 0.000000e+00 : f32
    %525 = vector.broadcast %cst_22 : f32 to vector<6x110xf32>
    %526 = arith.maximumf %524, %525 : vector<6x110xf32>
    %527 = vector.extract_strided_slice %492 {offsets = [0, 0], sizes = [6, 92], strides = [1, 1]} : vector<6x110xf32> to vector<6x92xf32>
    %c0_23 = arith.constant 0 : index
    %528 = memref.load %arg2[%c0_23] : memref<108xf32, #tpu.memory_space<smem>>
    %529 = vector.broadcast %528 : f32 to vector<6x92xf32>
    %530 = arith.mulf %527, %529 : vector<6x92xf32>
    %c9_24 = arith.constant 9 : index
    %531 = memref.load %arg2[%c9_24] : memref<108xf32, #tpu.memory_space<smem>>
    %532 = vector.broadcast %531 : f32 to vector<6x92xf32>
    %533 = arith.mulf %527, %532 : vector<6x92xf32>
    %c18_25 = arith.constant 18 : index
    %534 = memref.load %arg2[%c18_25] : memref<108xf32, #tpu.memory_space<smem>>
    %535 = vector.broadcast %534 : f32 to vector<6x92xf32>
    %536 = arith.mulf %527, %535 : vector<6x92xf32>
    %c54_26 = arith.constant 54 : index
    %537 = memref.load %arg2[%c54_26] : memref<108xf32, #tpu.memory_space<smem>>
    %538 = vector.broadcast %537 : f32 to vector<6x92xf32>
    %539 = arith.mulf %527, %538 : vector<6x92xf32>
    %c63_27 = arith.constant 63 : index
    %540 = memref.load %arg2[%c63_27] : memref<108xf32, #tpu.memory_space<smem>>
    %541 = vector.broadcast %540 : f32 to vector<6x92xf32>
    %542 = arith.mulf %527, %541 : vector<6x92xf32>
    %c72_28 = arith.constant 72 : index
    %543 = memref.load %arg2[%c72_28] : memref<108xf32, #tpu.memory_space<smem>>
    %544 = vector.broadcast %543 : f32 to vector<6x92xf32>
    %545 = arith.mulf %527, %544 : vector<6x92xf32>
    %546 = vector.extract_strided_slice %526 {offsets = [0, 0], sizes = [6, 92], strides = [1, 1]} : vector<6x110xf32> to vector<6x92xf32>
    %c27_29 = arith.constant 27 : index
    %547 = memref.load %arg2[%c27_29] : memref<108xf32, #tpu.memory_space<smem>>
    %548 = vector.broadcast %547 : f32 to vector<6x92xf32>
    %549 = arith.mulf %546, %548 : vector<6x92xf32>
    %550 = arith.addf %530, %549 : vector<6x92xf32>
    %c36_30 = arith.constant 36 : index
    %551 = memref.load %arg2[%c36_30] : memref<108xf32, #tpu.memory_space<smem>>
    %552 = vector.broadcast %551 : f32 to vector<6x92xf32>
    %553 = arith.mulf %546, %552 : vector<6x92xf32>
    %554 = arith.addf %533, %553 : vector<6x92xf32>
    %c45_31 = arith.constant 45 : index
    %555 = memref.load %arg2[%c45_31] : memref<108xf32, #tpu.memory_space<smem>>
    %556 = vector.broadcast %555 : f32 to vector<6x92xf32>
    %557 = arith.mulf %546, %556 : vector<6x92xf32>
    %558 = arith.addf %536, %557 : vector<6x92xf32>
    %c81_32 = arith.constant 81 : index
    %559 = memref.load %arg2[%c81_32] : memref<108xf32, #tpu.memory_space<smem>>
    %560 = vector.broadcast %559 : f32 to vector<6x92xf32>
    %561 = arith.mulf %546, %560 : vector<6x92xf32>
    %562 = arith.addf %539, %561 : vector<6x92xf32>
    %c90_33 = arith.constant 90 : index
    %563 = memref.load %arg2[%c90_33] : memref<108xf32, #tpu.memory_space<smem>>
    %564 = vector.broadcast %563 : f32 to vector<6x92xf32>
    %565 = arith.mulf %546, %564 : vector<6x92xf32>
    %566 = arith.addf %542, %565 : vector<6x92xf32>
    %c99_34 = arith.constant 99 : index
    %567 = memref.load %arg2[%c99_34] : memref<108xf32, #tpu.memory_space<smem>>
    %568 = vector.broadcast %567 : f32 to vector<6x92xf32>
    %569 = arith.mulf %546, %568 : vector<6x92xf32>
    %570 = arith.addf %545, %569 : vector<6x92xf32>
    %571 = vector.extract_strided_slice %492 {offsets = [0, 1], sizes = [6, 92], strides = [1, 1]} : vector<6x110xf32> to vector<6x92xf32>
    %c1_35 = arith.constant 1 : index
    %572 = memref.load %arg2[%c1_35] : memref<108xf32, #tpu.memory_space<smem>>
    %573 = vector.broadcast %572 : f32 to vector<6x92xf32>
    %574 = arith.mulf %571, %573 : vector<6x92xf32>
    %575 = arith.addf %550, %574 : vector<6x92xf32>
    %c10_36 = arith.constant 10 : index
    %576 = memref.load %arg2[%c10_36] : memref<108xf32, #tpu.memory_space<smem>>
    %577 = vector.broadcast %576 : f32 to vector<6x92xf32>
    %578 = arith.mulf %571, %577 : vector<6x92xf32>
    %579 = arith.addf %554, %578 : vector<6x92xf32>
    %c19_37 = arith.constant 19 : index
    %580 = memref.load %arg2[%c19_37] : memref<108xf32, #tpu.memory_space<smem>>
    %581 = vector.broadcast %580 : f32 to vector<6x92xf32>
    %582 = arith.mulf %571, %581 : vector<6x92xf32>
    %583 = arith.addf %558, %582 : vector<6x92xf32>
    %c55_38 = arith.constant 55 : index
    %584 = memref.load %arg2[%c55_38] : memref<108xf32, #tpu.memory_space<smem>>
    %585 = vector.broadcast %584 : f32 to vector<6x92xf32>
    %586 = arith.mulf %571, %585 : vector<6x92xf32>
    %587 = arith.addf %562, %586 : vector<6x92xf32>
    %c64_39 = arith.constant 64 : index
    %588 = memref.load %arg2[%c64_39] : memref<108xf32, #tpu.memory_space<smem>>
    %589 = vector.broadcast %588 : f32 to vector<6x92xf32>
    %590 = arith.mulf %571, %589 : vector<6x92xf32>
    %591 = arith.addf %566, %590 : vector<6x92xf32>
    %c73_40 = arith.constant 73 : index
    %592 = memref.load %arg2[%c73_40] : memref<108xf32, #tpu.memory_space<smem>>
    %593 = vector.broadcast %592 : f32 to vector<6x92xf32>
    %594 = arith.mulf %571, %593 : vector<6x92xf32>
    %595 = arith.addf %570, %594 : vector<6x92xf32>
    %596 = vector.extract_strided_slice %526 {offsets = [0, 1], sizes = [6, 92], strides = [1, 1]} : vector<6x110xf32> to vector<6x92xf32>
    %c28_41 = arith.constant 28 : index
    %597 = memref.load %arg2[%c28_41] : memref<108xf32, #tpu.memory_space<smem>>
    %598 = vector.broadcast %597 : f32 to vector<6x92xf32>
    %599 = arith.mulf %596, %598 : vector<6x92xf32>
    %600 = arith.addf %575, %599 : vector<6x92xf32>
    %c37_42 = arith.constant 37 : index
    %601 = memref.load %arg2[%c37_42] : memref<108xf32, #tpu.memory_space<smem>>
    %602 = vector.broadcast %601 : f32 to vector<6x92xf32>
    %603 = arith.mulf %596, %602 : vector<6x92xf32>
    %604 = arith.addf %579, %603 : vector<6x92xf32>
    %c46_43 = arith.constant 46 : index
    %605 = memref.load %arg2[%c46_43] : memref<108xf32, #tpu.memory_space<smem>>
    %606 = vector.broadcast %605 : f32 to vector<6x92xf32>
    %607 = arith.mulf %596, %606 : vector<6x92xf32>
    %608 = arith.addf %583, %607 : vector<6x92xf32>
    %c82_44 = arith.constant 82 : index
    %609 = memref.load %arg2[%c82_44] : memref<108xf32, #tpu.memory_space<smem>>
    %610 = vector.broadcast %609 : f32 to vector<6x92xf32>
    %611 = arith.mulf %596, %610 : vector<6x92xf32>
    %612 = arith.addf %587, %611 : vector<6x92xf32>
    %c91_45 = arith.constant 91 : index
    %613 = memref.load %arg2[%c91_45] : memref<108xf32, #tpu.memory_space<smem>>
    %614 = vector.broadcast %613 : f32 to vector<6x92xf32>
    %615 = arith.mulf %596, %614 : vector<6x92xf32>
    %616 = arith.addf %591, %615 : vector<6x92xf32>
    %c100_46 = arith.constant 100 : index
    %617 = memref.load %arg2[%c100_46] : memref<108xf32, #tpu.memory_space<smem>>
    %618 = vector.broadcast %617 : f32 to vector<6x92xf32>
    %619 = arith.mulf %596, %618 : vector<6x92xf32>
    %620 = arith.addf %595, %619 : vector<6x92xf32>
    %621 = vector.extract_strided_slice %492 {offsets = [0, 2], sizes = [6, 92], strides = [1, 1]} : vector<6x110xf32> to vector<6x92xf32>
    %c2_47 = arith.constant 2 : index
    %622 = memref.load %arg2[%c2_47] : memref<108xf32, #tpu.memory_space<smem>>
    %623 = vector.broadcast %622 : f32 to vector<6x92xf32>
    %624 = arith.mulf %621, %623 : vector<6x92xf32>
    %625 = arith.addf %600, %624 : vector<6x92xf32>
    %c11_48 = arith.constant 11 : index
    %626 = memref.load %arg2[%c11_48] : memref<108xf32, #tpu.memory_space<smem>>
    %627 = vector.broadcast %626 : f32 to vector<6x92xf32>
    %628 = arith.mulf %621, %627 : vector<6x92xf32>
    %629 = arith.addf %604, %628 : vector<6x92xf32>
    %c20_49 = arith.constant 20 : index
    %630 = memref.load %arg2[%c20_49] : memref<108xf32, #tpu.memory_space<smem>>
    %631 = vector.broadcast %630 : f32 to vector<6x92xf32>
    %632 = arith.mulf %621, %631 : vector<6x92xf32>
    %633 = arith.addf %608, %632 : vector<6x92xf32>
    %c56_50 = arith.constant 56 : index
    %634 = memref.load %arg2[%c56_50] : memref<108xf32, #tpu.memory_space<smem>>
    %635 = vector.broadcast %634 : f32 to vector<6x92xf32>
    %636 = arith.mulf %621, %635 : vector<6x92xf32>
    %637 = arith.addf %612, %636 : vector<6x92xf32>
    %c65_51 = arith.constant 65 : index
    %638 = memref.load %arg2[%c65_51] : memref<108xf32, #tpu.memory_space<smem>>
    %639 = vector.broadcast %638 : f32 to vector<6x92xf32>
    %640 = arith.mulf %621, %639 : vector<6x92xf32>
    %641 = arith.addf %616, %640 : vector<6x92xf32>
    %c74_52 = arith.constant 74 : index
    %642 = memref.load %arg2[%c74_52] : memref<108xf32, #tpu.memory_space<smem>>
    %643 = vector.broadcast %642 : f32 to vector<6x92xf32>
    %644 = arith.mulf %621, %643 : vector<6x92xf32>
    %645 = arith.addf %620, %644 : vector<6x92xf32>
    %646 = vector.extract_strided_slice %526 {offsets = [0, 2], sizes = [6, 92], strides = [1, 1]} : vector<6x110xf32> to vector<6x92xf32>
    %c29_53 = arith.constant 29 : index
    %647 = memref.load %arg2[%c29_53] : memref<108xf32, #tpu.memory_space<smem>>
    %648 = vector.broadcast %647 : f32 to vector<6x92xf32>
    %649 = arith.mulf %646, %648 : vector<6x92xf32>
    %650 = arith.addf %625, %649 : vector<6x92xf32>
    %c38_54 = arith.constant 38 : index
    %651 = memref.load %arg2[%c38_54] : memref<108xf32, #tpu.memory_space<smem>>
    %652 = vector.broadcast %651 : f32 to vector<6x92xf32>
    %653 = arith.mulf %646, %652 : vector<6x92xf32>
    %654 = arith.addf %629, %653 : vector<6x92xf32>
    %c47_55 = arith.constant 47 : index
    %655 = memref.load %arg2[%c47_55] : memref<108xf32, #tpu.memory_space<smem>>
    %656 = vector.broadcast %655 : f32 to vector<6x92xf32>
    %657 = arith.mulf %646, %656 : vector<6x92xf32>
    %658 = arith.addf %633, %657 : vector<6x92xf32>
    %c83_56 = arith.constant 83 : index
    %659 = memref.load %arg2[%c83_56] : memref<108xf32, #tpu.memory_space<smem>>
    %660 = vector.broadcast %659 : f32 to vector<6x92xf32>
    %661 = arith.mulf %646, %660 : vector<6x92xf32>
    %662 = arith.addf %637, %661 : vector<6x92xf32>
    %c92_57 = arith.constant 92 : index
    %663 = memref.load %arg2[%c92_57] : memref<108xf32, #tpu.memory_space<smem>>
    %664 = vector.broadcast %663 : f32 to vector<6x92xf32>
    %665 = arith.mulf %646, %664 : vector<6x92xf32>
    %666 = arith.addf %641, %665 : vector<6x92xf32>
    %c101_58 = arith.constant 101 : index
    %667 = memref.load %arg2[%c101_58] : memref<108xf32, #tpu.memory_space<smem>>
    %668 = vector.broadcast %667 : f32 to vector<6x92xf32>
    %669 = arith.mulf %646, %668 : vector<6x92xf32>
    %670 = arith.addf %645, %669 : vector<6x92xf32>
    %671 = vector.extract_strided_slice %492 {offsets = [0, 8], sizes = [6, 92], strides = [1, 1]} : vector<6x110xf32> to vector<6x92xf32>
    %c3_59 = arith.constant 3 : index
    %672 = memref.load %arg2[%c3_59] : memref<108xf32, #tpu.memory_space<smem>>
    %673 = vector.broadcast %672 : f32 to vector<6x92xf32>
    %674 = arith.mulf %671, %673 : vector<6x92xf32>
    %675 = arith.addf %650, %674 : vector<6x92xf32>
    %c12_60 = arith.constant 12 : index
    %676 = memref.load %arg2[%c12_60] : memref<108xf32, #tpu.memory_space<smem>>
    %677 = vector.broadcast %676 : f32 to vector<6x92xf32>
    %678 = arith.mulf %671, %677 : vector<6x92xf32>
    %679 = arith.addf %654, %678 : vector<6x92xf32>
    %c21_61 = arith.constant 21 : index
    %680 = memref.load %arg2[%c21_61] : memref<108xf32, #tpu.memory_space<smem>>
    %681 = vector.broadcast %680 : f32 to vector<6x92xf32>
    %682 = arith.mulf %671, %681 : vector<6x92xf32>
    %683 = arith.addf %658, %682 : vector<6x92xf32>
    %c57_62 = arith.constant 57 : index
    %684 = memref.load %arg2[%c57_62] : memref<108xf32, #tpu.memory_space<smem>>
    %685 = vector.broadcast %684 : f32 to vector<6x92xf32>
    %686 = arith.mulf %671, %685 : vector<6x92xf32>
    %687 = arith.addf %662, %686 : vector<6x92xf32>
    %c66_63 = arith.constant 66 : index
    %688 = memref.load %arg2[%c66_63] : memref<108xf32, #tpu.memory_space<smem>>
    %689 = vector.broadcast %688 : f32 to vector<6x92xf32>
    %690 = arith.mulf %671, %689 : vector<6x92xf32>
    %691 = arith.addf %666, %690 : vector<6x92xf32>
    %c75_64 = arith.constant 75 : index
    %692 = memref.load %arg2[%c75_64] : memref<108xf32, #tpu.memory_space<smem>>
    %693 = vector.broadcast %692 : f32 to vector<6x92xf32>
    %694 = arith.mulf %671, %693 : vector<6x92xf32>
    %695 = arith.addf %670, %694 : vector<6x92xf32>
    %696 = vector.extract_strided_slice %526 {offsets = [0, 8], sizes = [6, 92], strides = [1, 1]} : vector<6x110xf32> to vector<6x92xf32>
    %c30_65 = arith.constant 30 : index
    %697 = memref.load %arg2[%c30_65] : memref<108xf32, #tpu.memory_space<smem>>
    %698 = vector.broadcast %697 : f32 to vector<6x92xf32>
    %699 = arith.mulf %696, %698 : vector<6x92xf32>
    %700 = arith.addf %675, %699 : vector<6x92xf32>
    %c39_66 = arith.constant 39 : index
    %701 = memref.load %arg2[%c39_66] : memref<108xf32, #tpu.memory_space<smem>>
    %702 = vector.broadcast %701 : f32 to vector<6x92xf32>
    %703 = arith.mulf %696, %702 : vector<6x92xf32>
    %704 = arith.addf %679, %703 : vector<6x92xf32>
    %c48_67 = arith.constant 48 : index
    %705 = memref.load %arg2[%c48_67] : memref<108xf32, #tpu.memory_space<smem>>
    %706 = vector.broadcast %705 : f32 to vector<6x92xf32>
    %707 = arith.mulf %696, %706 : vector<6x92xf32>
    %708 = arith.addf %683, %707 : vector<6x92xf32>
    %c84_68 = arith.constant 84 : index
    %709 = memref.load %arg2[%c84_68] : memref<108xf32, #tpu.memory_space<smem>>
    %710 = vector.broadcast %709 : f32 to vector<6x92xf32>
    %711 = arith.mulf %696, %710 : vector<6x92xf32>
    %712 = arith.addf %687, %711 : vector<6x92xf32>
    %c93_69 = arith.constant 93 : index
    %713 = memref.load %arg2[%c93_69] : memref<108xf32, #tpu.memory_space<smem>>
    %714 = vector.broadcast %713 : f32 to vector<6x92xf32>
    %715 = arith.mulf %696, %714 : vector<6x92xf32>
    %716 = arith.addf %691, %715 : vector<6x92xf32>
    %c102_70 = arith.constant 102 : index
    %717 = memref.load %arg2[%c102_70] : memref<108xf32, #tpu.memory_space<smem>>
    %718 = vector.broadcast %717 : f32 to vector<6x92xf32>
    %719 = arith.mulf %696, %718 : vector<6x92xf32>
    %720 = arith.addf %695, %719 : vector<6x92xf32>
    %721 = vector.extract_strided_slice %492 {offsets = [0, 9], sizes = [6, 92], strides = [1, 1]} : vector<6x110xf32> to vector<6x92xf32>
    %c4_71 = arith.constant 4 : index
    %722 = memref.load %arg2[%c4_71] : memref<108xf32, #tpu.memory_space<smem>>
    %723 = vector.broadcast %722 : f32 to vector<6x92xf32>
    %724 = arith.mulf %721, %723 : vector<6x92xf32>
    %725 = arith.addf %700, %724 : vector<6x92xf32>
    %c13_72 = arith.constant 13 : index
    %726 = memref.load %arg2[%c13_72] : memref<108xf32, #tpu.memory_space<smem>>
    %727 = vector.broadcast %726 : f32 to vector<6x92xf32>
    %728 = arith.mulf %721, %727 : vector<6x92xf32>
    %729 = arith.addf %704, %728 : vector<6x92xf32>
    %c22_73 = arith.constant 22 : index
    %730 = memref.load %arg2[%c22_73] : memref<108xf32, #tpu.memory_space<smem>>
    %731 = vector.broadcast %730 : f32 to vector<6x92xf32>
    %732 = arith.mulf %721, %731 : vector<6x92xf32>
    %733 = arith.addf %708, %732 : vector<6x92xf32>
    %c58_74 = arith.constant 58 : index
    %734 = memref.load %arg2[%c58_74] : memref<108xf32, #tpu.memory_space<smem>>
    %735 = vector.broadcast %734 : f32 to vector<6x92xf32>
    %736 = arith.mulf %721, %735 : vector<6x92xf32>
    %737 = arith.addf %712, %736 : vector<6x92xf32>
    %c67_75 = arith.constant 67 : index
    %738 = memref.load %arg2[%c67_75] : memref<108xf32, #tpu.memory_space<smem>>
    %739 = vector.broadcast %738 : f32 to vector<6x92xf32>
    %740 = arith.mulf %721, %739 : vector<6x92xf32>
    %741 = arith.addf %716, %740 : vector<6x92xf32>
    %c76_76 = arith.constant 76 : index
    %742 = memref.load %arg2[%c76_76] : memref<108xf32, #tpu.memory_space<smem>>
    %743 = vector.broadcast %742 : f32 to vector<6x92xf32>
    %744 = arith.mulf %721, %743 : vector<6x92xf32>
    %745 = arith.addf %720, %744 : vector<6x92xf32>
    %746 = vector.extract_strided_slice %526 {offsets = [0, 9], sizes = [6, 92], strides = [1, 1]} : vector<6x110xf32> to vector<6x92xf32>
    %c31_77 = arith.constant 31 : index
    %747 = memref.load %arg2[%c31_77] : memref<108xf32, #tpu.memory_space<smem>>
    %748 = vector.broadcast %747 : f32 to vector<6x92xf32>
    %749 = arith.mulf %746, %748 : vector<6x92xf32>
    %750 = arith.addf %725, %749 : vector<6x92xf32>
    %c40_78 = arith.constant 40 : index
    %751 = memref.load %arg2[%c40_78] : memref<108xf32, #tpu.memory_space<smem>>
    %752 = vector.broadcast %751 : f32 to vector<6x92xf32>
    %753 = arith.mulf %746, %752 : vector<6x92xf32>
    %754 = arith.addf %729, %753 : vector<6x92xf32>
    %c49_79 = arith.constant 49 : index
    %755 = memref.load %arg2[%c49_79] : memref<108xf32, #tpu.memory_space<smem>>
    %756 = vector.broadcast %755 : f32 to vector<6x92xf32>
    %757 = arith.mulf %746, %756 : vector<6x92xf32>
    %758 = arith.addf %733, %757 : vector<6x92xf32>
    %c85_80 = arith.constant 85 : index
    %759 = memref.load %arg2[%c85_80] : memref<108xf32, #tpu.memory_space<smem>>
    %760 = vector.broadcast %759 : f32 to vector<6x92xf32>
    %761 = arith.mulf %746, %760 : vector<6x92xf32>
    %762 = arith.addf %737, %761 : vector<6x92xf32>
    %c94_81 = arith.constant 94 : index
    %763 = memref.load %arg2[%c94_81] : memref<108xf32, #tpu.memory_space<smem>>
    %764 = vector.broadcast %763 : f32 to vector<6x92xf32>
    %765 = arith.mulf %746, %764 : vector<6x92xf32>
    %766 = arith.addf %741, %765 : vector<6x92xf32>
    %c103_82 = arith.constant 103 : index
    %767 = memref.load %arg2[%c103_82] : memref<108xf32, #tpu.memory_space<smem>>
    %768 = vector.broadcast %767 : f32 to vector<6x92xf32>
    %769 = arith.mulf %746, %768 : vector<6x92xf32>
    %770 = arith.addf %745, %769 : vector<6x92xf32>
    %771 = vector.extract_strided_slice %492 {offsets = [0, 10], sizes = [6, 92], strides = [1, 1]} : vector<6x110xf32> to vector<6x92xf32>
    %c5_83 = arith.constant 5 : index
    %772 = memref.load %arg2[%c5_83] : memref<108xf32, #tpu.memory_space<smem>>
    %773 = vector.broadcast %772 : f32 to vector<6x92xf32>
    %774 = arith.mulf %771, %773 : vector<6x92xf32>
    %775 = arith.addf %750, %774 : vector<6x92xf32>
    %c14_84 = arith.constant 14 : index
    %776 = memref.load %arg2[%c14_84] : memref<108xf32, #tpu.memory_space<smem>>
    %777 = vector.broadcast %776 : f32 to vector<6x92xf32>
    %778 = arith.mulf %771, %777 : vector<6x92xf32>
    %779 = arith.addf %754, %778 : vector<6x92xf32>
    %c23_85 = arith.constant 23 : index
    %780 = memref.load %arg2[%c23_85] : memref<108xf32, #tpu.memory_space<smem>>
    %781 = vector.broadcast %780 : f32 to vector<6x92xf32>
    %782 = arith.mulf %771, %781 : vector<6x92xf32>
    %783 = arith.addf %758, %782 : vector<6x92xf32>
    %c59_86 = arith.constant 59 : index
    %784 = memref.load %arg2[%c59_86] : memref<108xf32, #tpu.memory_space<smem>>
    %785 = vector.broadcast %784 : f32 to vector<6x92xf32>
    %786 = arith.mulf %771, %785 : vector<6x92xf32>
    %787 = arith.addf %762, %786 : vector<6x92xf32>
    %c68_87 = arith.constant 68 : index
    %788 = memref.load %arg2[%c68_87] : memref<108xf32, #tpu.memory_space<smem>>
    %789 = vector.broadcast %788 : f32 to vector<6x92xf32>
    %790 = arith.mulf %771, %789 : vector<6x92xf32>
    %791 = arith.addf %766, %790 : vector<6x92xf32>
    %c77_88 = arith.constant 77 : index
    %792 = memref.load %arg2[%c77_88] : memref<108xf32, #tpu.memory_space<smem>>
    %793 = vector.broadcast %792 : f32 to vector<6x92xf32>
    %794 = arith.mulf %771, %793 : vector<6x92xf32>
    %795 = arith.addf %770, %794 : vector<6x92xf32>
    %796 = vector.extract_strided_slice %526 {offsets = [0, 10], sizes = [6, 92], strides = [1, 1]} : vector<6x110xf32> to vector<6x92xf32>
    %c32_89 = arith.constant 32 : index
    %797 = memref.load %arg2[%c32_89] : memref<108xf32, #tpu.memory_space<smem>>
    %798 = vector.broadcast %797 : f32 to vector<6x92xf32>
    %799 = arith.mulf %796, %798 : vector<6x92xf32>
    %800 = arith.addf %775, %799 : vector<6x92xf32>
    %c41_90 = arith.constant 41 : index
    %801 = memref.load %arg2[%c41_90] : memref<108xf32, #tpu.memory_space<smem>>
    %802 = vector.broadcast %801 : f32 to vector<6x92xf32>
    %803 = arith.mulf %796, %802 : vector<6x92xf32>
    %804 = arith.addf %779, %803 : vector<6x92xf32>
    %c50_91 = arith.constant 50 : index
    %805 = memref.load %arg2[%c50_91] : memref<108xf32, #tpu.memory_space<smem>>
    %806 = vector.broadcast %805 : f32 to vector<6x92xf32>
    %807 = arith.mulf %796, %806 : vector<6x92xf32>
    %808 = arith.addf %783, %807 : vector<6x92xf32>
    %c86_92 = arith.constant 86 : index
    %809 = memref.load %arg2[%c86_92] : memref<108xf32, #tpu.memory_space<smem>>
    %810 = vector.broadcast %809 : f32 to vector<6x92xf32>
    %811 = arith.mulf %796, %810 : vector<6x92xf32>
    %812 = arith.addf %787, %811 : vector<6x92xf32>
    %c95_93 = arith.constant 95 : index
    %813 = memref.load %arg2[%c95_93] : memref<108xf32, #tpu.memory_space<smem>>
    %814 = vector.broadcast %813 : f32 to vector<6x92xf32>
    %815 = arith.mulf %796, %814 : vector<6x92xf32>
    %816 = arith.addf %791, %815 : vector<6x92xf32>
    %c104_94 = arith.constant 104 : index
    %817 = memref.load %arg2[%c104_94] : memref<108xf32, #tpu.memory_space<smem>>
    %818 = vector.broadcast %817 : f32 to vector<6x92xf32>
    %819 = arith.mulf %796, %818 : vector<6x92xf32>
    %820 = arith.addf %795, %819 : vector<6x92xf32>
    %821 = vector.extract_strided_slice %492 {offsets = [0, 16], sizes = [6, 92], strides = [1, 1]} : vector<6x110xf32> to vector<6x92xf32>
    %c6_95 = arith.constant 6 : index
    %822 = memref.load %arg2[%c6_95] : memref<108xf32, #tpu.memory_space<smem>>
    %823 = vector.broadcast %822 : f32 to vector<6x92xf32>
    %824 = arith.mulf %821, %823 : vector<6x92xf32>
    %825 = arith.addf %800, %824 : vector<6x92xf32>
    %c15_96 = arith.constant 15 : index
    %826 = memref.load %arg2[%c15_96] : memref<108xf32, #tpu.memory_space<smem>>
    %827 = vector.broadcast %826 : f32 to vector<6x92xf32>
    %828 = arith.mulf %821, %827 : vector<6x92xf32>
    %829 = arith.addf %804, %828 : vector<6x92xf32>
    %c24_97 = arith.constant 24 : index
    %830 = memref.load %arg2[%c24_97] : memref<108xf32, #tpu.memory_space<smem>>
    %831 = vector.broadcast %830 : f32 to vector<6x92xf32>
    %832 = arith.mulf %821, %831 : vector<6x92xf32>
    %833 = arith.addf %808, %832 : vector<6x92xf32>
    %c60_98 = arith.constant 60 : index
    %834 = memref.load %arg2[%c60_98] : memref<108xf32, #tpu.memory_space<smem>>
    %835 = vector.broadcast %834 : f32 to vector<6x92xf32>
    %836 = arith.mulf %821, %835 : vector<6x92xf32>
    %837 = arith.addf %812, %836 : vector<6x92xf32>
    %c69_99 = arith.constant 69 : index
    %838 = memref.load %arg2[%c69_99] : memref<108xf32, #tpu.memory_space<smem>>
    %839 = vector.broadcast %838 : f32 to vector<6x92xf32>
    %840 = arith.mulf %821, %839 : vector<6x92xf32>
    %841 = arith.addf %816, %840 : vector<6x92xf32>
    %c78_100 = arith.constant 78 : index
    %842 = memref.load %arg2[%c78_100] : memref<108xf32, #tpu.memory_space<smem>>
    %843 = vector.broadcast %842 : f32 to vector<6x92xf32>
    %844 = arith.mulf %821, %843 : vector<6x92xf32>
    %845 = arith.addf %820, %844 : vector<6x92xf32>
    %846 = vector.extract_strided_slice %526 {offsets = [0, 16], sizes = [6, 92], strides = [1, 1]} : vector<6x110xf32> to vector<6x92xf32>
    %c33_101 = arith.constant 33 : index
    %847 = memref.load %arg2[%c33_101] : memref<108xf32, #tpu.memory_space<smem>>
    %848 = vector.broadcast %847 : f32 to vector<6x92xf32>
    %849 = arith.mulf %846, %848 : vector<6x92xf32>
    %850 = arith.addf %825, %849 : vector<6x92xf32>
    %c42_102 = arith.constant 42 : index
    %851 = memref.load %arg2[%c42_102] : memref<108xf32, #tpu.memory_space<smem>>
    %852 = vector.broadcast %851 : f32 to vector<6x92xf32>
    %853 = arith.mulf %846, %852 : vector<6x92xf32>
    %854 = arith.addf %829, %853 : vector<6x92xf32>
    %c51_103 = arith.constant 51 : index
    %855 = memref.load %arg2[%c51_103] : memref<108xf32, #tpu.memory_space<smem>>
    %856 = vector.broadcast %855 : f32 to vector<6x92xf32>
    %857 = arith.mulf %846, %856 : vector<6x92xf32>
    %858 = arith.addf %833, %857 : vector<6x92xf32>
    %c87_104 = arith.constant 87 : index
    %859 = memref.load %arg2[%c87_104] : memref<108xf32, #tpu.memory_space<smem>>
    %860 = vector.broadcast %859 : f32 to vector<6x92xf32>
    %861 = arith.mulf %846, %860 : vector<6x92xf32>
    %862 = arith.addf %837, %861 : vector<6x92xf32>
    %c96_105 = arith.constant 96 : index
    %863 = memref.load %arg2[%c96_105] : memref<108xf32, #tpu.memory_space<smem>>
    %864 = vector.broadcast %863 : f32 to vector<6x92xf32>
    %865 = arith.mulf %846, %864 : vector<6x92xf32>
    %866 = arith.addf %841, %865 : vector<6x92xf32>
    %c105_106 = arith.constant 105 : index
    %867 = memref.load %arg2[%c105_106] : memref<108xf32, #tpu.memory_space<smem>>
    %868 = vector.broadcast %867 : f32 to vector<6x92xf32>
    %869 = arith.mulf %846, %868 : vector<6x92xf32>
    %870 = arith.addf %845, %869 : vector<6x92xf32>
    %871 = vector.extract_strided_slice %492 {offsets = [0, 17], sizes = [6, 92], strides = [1, 1]} : vector<6x110xf32> to vector<6x92xf32>
    %c7_107 = arith.constant 7 : index
    %872 = memref.load %arg2[%c7_107] : memref<108xf32, #tpu.memory_space<smem>>
    %873 = vector.broadcast %872 : f32 to vector<6x92xf32>
    %874 = arith.mulf %871, %873 : vector<6x92xf32>
    %875 = arith.addf %850, %874 : vector<6x92xf32>
    %c16_108 = arith.constant 16 : index
    %876 = memref.load %arg2[%c16_108] : memref<108xf32, #tpu.memory_space<smem>>
    %877 = vector.broadcast %876 : f32 to vector<6x92xf32>
    %878 = arith.mulf %871, %877 : vector<6x92xf32>
    %879 = arith.addf %854, %878 : vector<6x92xf32>
    %c25_109 = arith.constant 25 : index
    %880 = memref.load %arg2[%c25_109] : memref<108xf32, #tpu.memory_space<smem>>
    %881 = vector.broadcast %880 : f32 to vector<6x92xf32>
    %882 = arith.mulf %871, %881 : vector<6x92xf32>
    %883 = arith.addf %858, %882 : vector<6x92xf32>
    %c61_110 = arith.constant 61 : index
    %884 = memref.load %arg2[%c61_110] : memref<108xf32, #tpu.memory_space<smem>>
    %885 = vector.broadcast %884 : f32 to vector<6x92xf32>
    %886 = arith.mulf %871, %885 : vector<6x92xf32>
    %887 = arith.addf %862, %886 : vector<6x92xf32>
    %c70_111 = arith.constant 70 : index
    %888 = memref.load %arg2[%c70_111] : memref<108xf32, #tpu.memory_space<smem>>
    %889 = vector.broadcast %888 : f32 to vector<6x92xf32>
    %890 = arith.mulf %871, %889 : vector<6x92xf32>
    %891 = arith.addf %866, %890 : vector<6x92xf32>
    %c79_112 = arith.constant 79 : index
    %892 = memref.load %arg2[%c79_112] : memref<108xf32, #tpu.memory_space<smem>>
    %893 = vector.broadcast %892 : f32 to vector<6x92xf32>
    %894 = arith.mulf %871, %893 : vector<6x92xf32>
    %895 = arith.addf %870, %894 : vector<6x92xf32>
    %896 = vector.extract_strided_slice %526 {offsets = [0, 17], sizes = [6, 92], strides = [1, 1]} : vector<6x110xf32> to vector<6x92xf32>
    %c34_113 = arith.constant 34 : index
    %897 = memref.load %arg2[%c34_113] : memref<108xf32, #tpu.memory_space<smem>>
    %898 = vector.broadcast %897 : f32 to vector<6x92xf32>
    %899 = arith.mulf %896, %898 : vector<6x92xf32>
    %900 = arith.addf %875, %899 : vector<6x92xf32>
    %c43_114 = arith.constant 43 : index
    %901 = memref.load %arg2[%c43_114] : memref<108xf32, #tpu.memory_space<smem>>
    %902 = vector.broadcast %901 : f32 to vector<6x92xf32>
    %903 = arith.mulf %896, %902 : vector<6x92xf32>
    %904 = arith.addf %879, %903 : vector<6x92xf32>
    %c52_115 = arith.constant 52 : index
    %905 = memref.load %arg2[%c52_115] : memref<108xf32, #tpu.memory_space<smem>>
    %906 = vector.broadcast %905 : f32 to vector<6x92xf32>
    %907 = arith.mulf %896, %906 : vector<6x92xf32>
    %908 = arith.addf %883, %907 : vector<6x92xf32>
    %c88_116 = arith.constant 88 : index
    %909 = memref.load %arg2[%c88_116] : memref<108xf32, #tpu.memory_space<smem>>
    %910 = vector.broadcast %909 : f32 to vector<6x92xf32>
    %911 = arith.mulf %896, %910 : vector<6x92xf32>
    %912 = arith.addf %887, %911 : vector<6x92xf32>
    %c97_117 = arith.constant 97 : index
    %913 = memref.load %arg2[%c97_117] : memref<108xf32, #tpu.memory_space<smem>>
    %914 = vector.broadcast %913 : f32 to vector<6x92xf32>
    %915 = arith.mulf %896, %914 : vector<6x92xf32>
    %916 = arith.addf %891, %915 : vector<6x92xf32>
    %c106_118 = arith.constant 106 : index
    %917 = memref.load %arg2[%c106_118] : memref<108xf32, #tpu.memory_space<smem>>
    %918 = vector.broadcast %917 : f32 to vector<6x92xf32>
    %919 = arith.mulf %896, %918 : vector<6x92xf32>
    %920 = arith.addf %895, %919 : vector<6x92xf32>
    %921 = vector.extract_strided_slice %492 {offsets = [0, 18], sizes = [6, 92], strides = [1, 1]} : vector<6x110xf32> to vector<6x92xf32>
    %c8_119 = arith.constant 8 : index
    %922 = memref.load %arg2[%c8_119] : memref<108xf32, #tpu.memory_space<smem>>
    %923 = vector.broadcast %922 : f32 to vector<6x92xf32>
    %924 = arith.mulf %921, %923 : vector<6x92xf32>
    %925 = arith.addf %900, %924 : vector<6x92xf32>
    %c17_120 = arith.constant 17 : index
    %926 = memref.load %arg2[%c17_120] : memref<108xf32, #tpu.memory_space<smem>>
    %927 = vector.broadcast %926 : f32 to vector<6x92xf32>
    %928 = arith.mulf %921, %927 : vector<6x92xf32>
    %929 = arith.addf %904, %928 : vector<6x92xf32>
    %c26_121 = arith.constant 26 : index
    %930 = memref.load %arg2[%c26_121] : memref<108xf32, #tpu.memory_space<smem>>
    %931 = vector.broadcast %930 : f32 to vector<6x92xf32>
    %932 = arith.mulf %921, %931 : vector<6x92xf32>
    %933 = arith.addf %908, %932 : vector<6x92xf32>
    %c62_122 = arith.constant 62 : index
    %934 = memref.load %arg2[%c62_122] : memref<108xf32, #tpu.memory_space<smem>>
    %935 = vector.broadcast %934 : f32 to vector<6x92xf32>
    %936 = arith.mulf %921, %935 : vector<6x92xf32>
    %937 = arith.addf %912, %936 : vector<6x92xf32>
    %c71_123 = arith.constant 71 : index
    %938 = memref.load %arg2[%c71_123] : memref<108xf32, #tpu.memory_space<smem>>
    %939 = vector.broadcast %938 : f32 to vector<6x92xf32>
    %940 = arith.mulf %921, %939 : vector<6x92xf32>
    %941 = arith.addf %916, %940 : vector<6x92xf32>
    %c80_124 = arith.constant 80 : index
    %942 = memref.load %arg2[%c80_124] : memref<108xf32, #tpu.memory_space<smem>>
    %943 = vector.broadcast %942 : f32 to vector<6x92xf32>
    %944 = arith.mulf %921, %943 : vector<6x92xf32>
    %945 = arith.addf %920, %944 : vector<6x92xf32>
    %946 = vector.extract_strided_slice %526 {offsets = [0, 18], sizes = [6, 92], strides = [1, 1]} : vector<6x110xf32> to vector<6x92xf32>
    %c35_125 = arith.constant 35 : index
    %947 = memref.load %arg2[%c35_125] : memref<108xf32, #tpu.memory_space<smem>>
    %948 = vector.broadcast %947 : f32 to vector<6x92xf32>
    %949 = arith.mulf %946, %948 : vector<6x92xf32>
    %950 = arith.addf %925, %949 : vector<6x92xf32>
    %c44_126 = arith.constant 44 : index
    %951 = memref.load %arg2[%c44_126] : memref<108xf32, #tpu.memory_space<smem>>
    %952 = vector.broadcast %951 : f32 to vector<6x92xf32>
    %953 = arith.mulf %946, %952 : vector<6x92xf32>
    %954 = arith.addf %929, %953 : vector<6x92xf32>
    %c53_127 = arith.constant 53 : index
    %955 = memref.load %arg2[%c53_127] : memref<108xf32, #tpu.memory_space<smem>>
    %956 = vector.broadcast %955 : f32 to vector<6x92xf32>
    %957 = arith.mulf %946, %956 : vector<6x92xf32>
    %958 = arith.addf %933, %957 : vector<6x92xf32>
    %c89_128 = arith.constant 89 : index
    %959 = memref.load %arg2[%c89_128] : memref<108xf32, #tpu.memory_space<smem>>
    %960 = vector.broadcast %959 : f32 to vector<6x92xf32>
    %961 = arith.mulf %946, %960 : vector<6x92xf32>
    %962 = arith.addf %937, %961 : vector<6x92xf32>
    %c98_129 = arith.constant 98 : index
    %963 = memref.load %arg2[%c98_129] : memref<108xf32, #tpu.memory_space<smem>>
    %964 = vector.broadcast %963 : f32 to vector<6x92xf32>
    %965 = arith.mulf %946, %964 : vector<6x92xf32>
    %966 = arith.addf %941, %965 : vector<6x92xf32>
    %c107_130 = arith.constant 107 : index
    %967 = memref.load %arg2[%c107_130] : memref<108xf32, #tpu.memory_space<smem>>
    %968 = vector.broadcast %967 : f32 to vector<6x92xf32>
    %969 = arith.mulf %946, %968 : vector<6x92xf32>
    %970 = arith.addf %945, %969 : vector<6x92xf32>
    %971 = vector.extract_strided_slice %950 {offsets = [0, 0], sizes = [4, 92], strides = [1, 1]} : vector<6x92xf32> to vector<4x92xf32>
    %972 = vector.extract_strided_slice %954 {offsets = [1, 0], sizes = [4, 92], strides = [1, 1]} : vector<6x92xf32> to vector<4x92xf32>
    %973 = arith.addf %971, %972 : vector<4x92xf32>
    %974 = vector.extract_strided_slice %958 {offsets = [2, 0], sizes = [4, 92], strides = [1, 1]} : vector<6x92xf32> to vector<4x92xf32>
    %975 = arith.addf %973, %974 : vector<4x92xf32>
    %976 = vector.extract_strided_slice %962 {offsets = [0, 0], sizes = [4, 92], strides = [1, 1]} : vector<6x92xf32> to vector<4x92xf32>
    %977 = vector.extract_strided_slice %966 {offsets = [1, 0], sizes = [4, 92], strides = [1, 1]} : vector<6x92xf32> to vector<4x92xf32>
    %978 = arith.addf %976, %977 : vector<4x92xf32>
    %979 = vector.extract_strided_slice %970 {offsets = [2, 0], sizes = [4, 92], strides = [1, 1]} : vector<6x92xf32> to vector<4x92xf32>
    %980 = arith.addf %978, %979 : vector<4x92xf32>
    %c0_131 = arith.constant 0 : index
    %c0_132 = arith.constant 0 : index
    %981 = vector.load %arg6[%c0_131, %c0_132] : memref<4x92xf32, #tpu.memory_space<vmem>>, vector<4x92xf32>
    %c0_133 = arith.constant 0 : index
    %982 = memref.load %arg3[%c0_133] : memref<2xf32, #tpu.memory_space<smem>>
    %c0_134 = arith.constant 0 : index
    %983 = memref.load %arg4[%c0_134] : memref<2xf32, #tpu.memory_space<smem>>
    %984 = arith.mulf %975, %981 : vector<4x92xf32>
    %985 = vector.shape_cast %984 : vector<4x92xf32> to vector<1x4x92xf32>
    %cst_135 = arith.constant dense<0.000000e+00> : vector<1xf32>
    %986 = vector.multi_reduction <add>, %985, %cst_135 [1, 2] : vector<1x4x92xf32> to vector<1xf32>
    %987 = vector.shape_cast %986 : vector<1xf32> to vector<1x1x1xf32>
    %988 = vector.extract %987[0, 0, 0] : f32 from vector<1x1x1xf32>
    %989 = vector.broadcast %988 : f32 to vector<1x1xf32>
    %cst_136 = arith.constant 7.812500e-03 : f32
    %990 = vector.broadcast %cst_136 : f32 to vector<1x1xf32>
    %991 = arith.mulf %989, %990 : vector<1x1xf32>
    %992 = arith.mulf %984, %975 : vector<4x92xf32>
    %993 = vector.shape_cast %992 : vector<4x92xf32> to vector<1x4x92xf32>
    %cst_137 = arith.constant dense<0.000000e+00> : vector<1xf32>
    %994 = vector.multi_reduction <add>, %993, %cst_137 [1, 2] : vector<1x4x92xf32> to vector<1xf32>
    %995 = vector.shape_cast %994 : vector<1xf32> to vector<1x1x1xf32>
    %996 = vector.extract %995[0, 0, 0] : f32 from vector<1x1x1xf32>
    %997 = vector.broadcast %996 : f32 to vector<1x1xf32>
    %cst_138 = arith.constant 7.812500e-03 : f32
    %998 = vector.broadcast %cst_138 : f32 to vector<1x1xf32>
    %999 = arith.mulf %997, %998 : vector<1x1xf32>
    %1000 = arith.mulf %991, %991 : vector<1x1xf32>
    %1001 = arith.subf %999, %1000 : vector<1x1xf32>
    %cst_139 = arith.constant 9.99999974E-6 : f32
    %1002 = vector.broadcast %cst_139 : f32 to vector<1x1xf32>
    %1003 = arith.addf %1001, %1002 : vector<1x1xf32>
    %1004 = math.rsqrt %1003 : vector<1x1xf32>
    %1005 = vector.broadcast %982 : f32 to vector<1x1xf32>
    %1006 = arith.mulf %1005, %1004 : vector<1x1xf32>
    %1007 = arith.mulf %991, %1006 : vector<1x1xf32>
    %1008 = vector.broadcast %983 : f32 to vector<1x1xf32>
    %1009 = arith.subf %1008, %1007 : vector<1x1xf32>
    %1010 = vector.broadcast %1006 : vector<1x1xf32> to vector<4x92xf32>
    %1011 = arith.mulf %975, %1010 : vector<4x92xf32>
    %1012 = vector.broadcast %1009 : vector<1x1xf32> to vector<4x92xf32>
    %1013 = arith.addf %1011, %1012 : vector<4x92xf32>
    %cst_140 = arith.constant 0.000000e+00 : f32
    %1014 = vector.broadcast %cst_140 : f32 to vector<4x92xf32>
    %1015 = arith.maximumf %1013, %1014 : vector<4x92xf32>
    %c0_141 = arith.constant 0 : index
    %c0_142 = arith.constant 0 : index
    %c0_143 = arith.constant 0 : index
    %1016 = vector.load %arg7[%c0_141, %c0_142, %c0_143] : memref<2x4x92xf32, #tpu.memory_space<vmem>>, vector<1x4x92xf32>
    %1017 = vector.shape_cast %1016 : vector<1x4x92xf32> to vector<4x92xf32>
    %1018 = vector.shape_cast %1015 : vector<4x92xf32> to vector<1x4x92xf32>
    tpu.vector_store %arg7[%c0_141, %c0_142, %c0_143], %1018 {strides = array<i32>} : memref<2x4x92xf32, #tpu.memory_space<vmem>>, vector<1x4x92xf32>,
    %c1_144 = arith.constant 1 : index
    %1019 = memref.load %arg3[%c1_144] : memref<2xf32, #tpu.memory_space<smem>>
    %c1_145 = arith.constant 1 : index
    %1020 = memref.load %arg4[%c1_145] : memref<2xf32, #tpu.memory_space<smem>>
    %1021 = arith.mulf %980, %981 : vector<4x92xf32>
    %1022 = vector.shape_cast %1021 : vector<4x92xf32> to vector<1x4x92xf32>
    %cst_146 = arith.constant dense<0.000000e+00> : vector<1xf32>
    %1023 = vector.multi_reduction <add>, %1022, %cst_146 [1, 2] : vector<1x4x92xf32> to vector<1xf32>
    %1024 = vector.shape_cast %1023 : vector<1xf32> to vector<1x1x1xf32>
    %1025 = vector.extract %1024[0, 0, 0] : f32 from vector<1x1x1xf32>
    %1026 = vector.broadcast %1025 : f32 to vector<1x1xf32>
    %cst_147 = arith.constant 7.812500e-03 : f32
    %1027 = vector.broadcast %cst_147 : f32 to vector<1x1xf32>
    %1028 = arith.mulf %1026, %1027 : vector<1x1xf32>
    %1029 = arith.mulf %1021, %980 : vector<4x92xf32>
    %1030 = vector.shape_cast %1029 : vector<4x92xf32> to vector<1x4x92xf32>
    %cst_148 = arith.constant dense<0.000000e+00> : vector<1xf32>
    %1031 = vector.multi_reduction <add>, %1030, %cst_148 [1, 2] : vector<1x4x92xf32> to vector<1xf32>
    %1032 = vector.shape_cast %1031 : vector<1xf32> to vector<1x1x1xf32>
    %1033 = vector.extract %1032[0, 0, 0] : f32 from vector<1x1x1xf32>
    %1034 = vector.broadcast %1033 : f32 to vector<1x1xf32>
    %cst_149 = arith.constant 7.812500e-03 : f32
    %1035 = vector.broadcast %cst_149 : f32 to vector<1x1xf32>
    %1036 = arith.mulf %1034, %1035 : vector<1x1xf32>
    %1037 = arith.mulf %1028, %1028 : vector<1x1xf32>
    %1038 = arith.subf %1036, %1037 : vector<1x1xf32>
    %cst_150 = arith.constant 9.99999974E-6 : f32
    %1039 = vector.broadcast %cst_150 : f32 to vector<1x1xf32>
    %1040 = arith.addf %1038, %1039 : vector<1x1xf32>
    %1041 = math.rsqrt %1040 : vector<1x1xf32>
    %1042 = vector.broadcast %1019 : f32 to vector<1x1xf32>
    %1043 = arith.mulf %1042, %1041 : vector<1x1xf32>
    %1044 = arith.mulf %1028, %1043 : vector<1x1xf32>
    %1045 = vector.broadcast %1020 : f32 to vector<1x1xf32>
    %1046 = arith.subf %1045, %1044 : vector<1x1xf32>
    %1047 = vector.broadcast %1043 : vector<1x1xf32> to vector<4x92xf32>
    %1048 = arith.mulf %980, %1047 : vector<4x92xf32>
    %1049 = vector.broadcast %1046 : vector<1x1xf32> to vector<4x92xf32>
    %1050 = arith.addf %1048, %1049 : vector<4x92xf32>
    %cst_151 = arith.constant 0.000000e+00 : f32
    %1051 = vector.broadcast %cst_151 : f32 to vector<4x92xf32>
    %1052 = arith.maximumf %1050, %1051 : vector<4x92xf32>
    %c1_152 = arith.constant 1 : index
    %c0_153 = arith.constant 0 : index
    %c0_154 = arith.constant 0 : index
    %1053 = vector.load %arg7[%c1_152, %c0_153, %c0_154] : memref<2x4x92xf32, #tpu.memory_space<vmem>>, vector<1x4x92xf32>
    %1054 = vector.shape_cast %1053 : vector<1x4x92xf32> to vector<4x92xf32>
    %1055 = vector.shape_cast %1052 : vector<4x92xf32> to vector<1x4x92xf32>
    tpu.vector_store %arg7[%c1_152, %c0_153, %c0_154], %1055 {strides = array<i32>} : memref<2x4x92xf32, #tpu.memory_space<vmem>>, vector<1x4x92xf32>,
    return
  }
}

</mosaic_0001>

<llo_original>
// kernel: forward.1
$region0: #{forward.1}
  #allocation0 [shape = 'u32[]', space=smem, size = 0x4, offset = 0x4, fixed_abs, tag = 'smem constant byte address 0x4 - core index']
  #allocation1 [shape = 'u32[144,128]{1,0:T(1,128)}', space=vmem, size = 0x12000, scoped, tag = 'internal scratch']
  %s0 = inlined_call_operand.vmem [shape: f32[2,8,128], index: 0, kind: input, shape index: {}]
  %s1 = inlined_call_operand.vmem [shape: f32[108], index: 1, kind: input, shape index: {}]
  %s2 = inlined_call_operand.vmem [shape: f32[108], index: 2, kind: input, shape index: {}]
  %s3 = inlined_call_operand.vmem [shape: f32[2], index: 3, kind: input, shape index: {}]
  %s4 = inlined_call_operand.vmem [shape: f32[2], index: 4, kind: input, shape index: {}]
  %s5 = inlined_call_operand.vmem [shape: f32[6,110], index: 5, kind: input, shape index: {}]
  %s6 = inlined_call_operand.vmem [shape: f32[4,92], index: 6, kind: input, shape index: {}]
  %s7 = inlined_call_operand.vmem [shape: f32[2,4,92], index: 7, kind: output, shape index: {}]
  %s8 = sld [smem:[#allocation0]]
  $region54: #{forward.1} parent=0
    _
  %s10 = ssub.s32 1, %s8
  %s11 = scalar_select 0, %s10, %s8
  $region1: #{forward.1} parent=0
    #allocation2 [shape = 'u8[512]{0}', space=smem, size = 0x200, scoped, tag = 'input window, operand 1, single buffered']
    #allocation3 [shape = 's32[1]{0}', space=sflag, size = 0x4, scoped, tag = 'scoped memory for forward.1']
    #allocation4 [shape = 'u8[512]{0}', space=smem, size = 0x200, scoped, tag = 'input window, operand 2, single buffered']
    #allocation5 [shape = 's32[1]{0}', space=sflag, size = 0x4, scoped, tag = 'scoped memory for forward.1']
    #allocation6 [shape = 'u8[512]{0}', space=smem, size = 0x200, scoped, tag = 'input window, operand 3, single buffered']
    #allocation7 [shape = 'u8[512]{0}', space=smem, size = 0x200, scoped, tag = 'input window, operand 4, single buffered']
    #allocation8 [shape = 's32[1]{0}', space=sflag, size = 0x4, scoped, tag = 'scoped memory for forward.1']
    %12 = vsyncpa [#allocation3], 0
    %13 = vsyncpa [#allocation5], 0
    %14 = vsyncpa [#allocation8], 0
    // Predicated region
    $region2: #{forward.1} parent=1 // pred_check
      _
    $region3: #{forward.1} parent=1 // pred_check_branch
      %16 = sbr.rel (0) target = $region5
    $region4: #{forward.1} parent=1 // pred_region
      _
    $region5: #{forward.1} parent=1 // pred_fallthru
      _
    // Predicated region
    $region6: #{forward.1} parent=1 // pred_check
      _
    $region7: #{forward.1} parent=1 // pred_check_branch
      %18 = sbr.rel (0) target = $region9
    $region8: #{forward.1} parent=1 // pred_region
      %s20 = ssub.s32 16, 16
      %21 = vsyncadd [#allocation3], %s20
      %s23 = sshll.u32 %s1, 4
      %s24 = int_to_ptr.vmem [resolvable:$true] %s23
      %26 = dma.vmem_to_smem %s24, 16, [#allocation2], [#allocation3]
    $region9: #{forward.1} parent=1 // pred_fallthru
      _
    // Predicated region
    $region10: #{forward.1} parent=1 // pred_check
      _
    $region11: #{forward.1} parent=1 // pred_check_branch
      %28 = sbr.rel (0) target = $region13
    $region12: #{forward.1} parent=1 // pred_region
      %s30 = ssub.s32 16, 16
      %31 = vsyncadd [#allocation5], %s30
      %s33 = sshll.u32 %s2, 4
      %s34 = int_to_ptr.vmem [resolvable:$true] %s33
      %36 = dma.vmem_to_smem %s34, 16, [#allocation4], [#allocation5]
    $region13: #{forward.1} parent=1 // pred_fallthru
      _
    // Predicated region
    $region14: #{forward.1} parent=1 // pred_check
      _
    $region15: #{forward.1} parent=1 // pred_check_branch
      %38 = sbr.rel (0) target = $region17
    $region16: #{forward.1} parent=1 // pred_region
      %s40 = ssub.s32 16, 16
      %41 = vsyncadd [#allocation5], %s40
      %s43 = sshll.u32 %s3, 4
      %s44 = int_to_ptr.vmem [resolvable:$true] %s43
      %46 = dma.vmem_to_smem %s44, 16, [#allocation6], [#allocation5]
    $region17: #{forward.1} parent=1 // pred_fallthru
      _
    // Predicated region
    $region18: #{forward.1} parent=1 // pred_check
      _
    $region19: #{forward.1} parent=1 // pred_check_branch
      %48 = sbr.rel (0) target = $region21
    $region20: #{forward.1} parent=1 // pred_region
      %s50 = ssub.s32 16, 16
      %51 = vsyncadd [#allocation8], %s50
      %s53 = sshll.u32 %s4, 4
      %s54 = int_to_ptr.vmem [resolvable:$true] %s53
      %56 = dma.vmem_to_smem %s54, 16, [#allocation7], [#allocation8]
    $region21: #{forward.1} parent=1 // pred_fallthru
      _
    // Predicated region
    $region22: #{forward.1} parent=1 // pred_check
      _
    $region23: #{forward.1} parent=1 // pred_check_branch
      %58 = sbr.rel (0) target = $region25
    $region24: #{forward.1} parent=1 // pred_region
      _
    $region25: #{forward.1} parent=1 // pred_fallthru
      _
    // Predicated region
    $region26: #{forward.1} parent=1 // pred_check
      _
    $region27: #{forward.1} parent=1 // pred_check_branch
      %60 = sbr.rel (0) target = $region29
    $region28: #{forward.1} parent=1 // pred_region
      _
    $region29: #{forward.1} parent=1 // pred_fallthru
      _
    // Predicated region
    $region30: #{forward.1} parent=1 // pred_check
      _
    $region31: #{forward.1} parent=1 // pred_check_branch
      %62 = sbr.rel (0) target = $region33
    $region32: #{forward.1} parent=1 // pred_region
      %63 = dma.done [#allocation3], 16
    $region33: #{forward.1} parent=1 // pred_fallthru
      _
    // Predicated region
    $region34: #{forward.1} parent=1 // pred_check
      _
    $region35: #{forward.1} parent=1 // pred_check_branch
      %65 = sbr.rel (0) target = $region37
    $region36: #{forward.1} parent=1 // pred_region
      %66 = dma.done [#allocation5], 16
    $region37: #{forward.1} parent=1 // pred_fallthru
      _
    // Predicated region
    $region38: #{forward.1} parent=1 // pred_check
      _
    $region39: #{forward.1} parent=1 // pred_check_branch
      %68 = sbr.rel (0) target = $region41
    $region40: #{forward.1} parent=1 // pred_region
      %69 = dma.done [#allocation5], 16
    $region41: #{forward.1} parent=1 // pred_fallthru
      _
    // Predicated region
    $region42: #{forward.1} parent=1 // pred_check
      _
    $region43: #{forward.1} parent=1 // pred_check_branch
      %71 = sbr.rel (0) target = $region45
    $region44: #{forward.1} parent=1 // pred_region
      %72 = dma.done [#allocation8], 16
    $region45: #{forward.1} parent=1 // pred_fallthru
      _
    %73 = sfence
    %v74 = vld [vmem:[%s0] sm:$0xff]
    %s75 = scalar_lea.vmem %s0, 8
    %v76 = vld [vmem:[%s75] sm:$0xff]
    %s77 = sld [smem:[#allocation2]]
    %v78 = vstv %s77
    %v79 = vmul.f32 %v74, %v78
    %s80 = sld [smem:[#allocation2 + $0x9]]
    %v81 = vstv %s80
    %v82 = vmul.f32 %v74, %v81
    %s83 = sld [smem:[#allocation2 + $0x12]]
    %v84 = vstv %s83
    %v85 = vmul.f32 %v74, %v84
    %s86 = sld [smem:[#allocation2 + $0x36]]
    %v87 = vstv %s86
    %v88 = vmul.f32 %v74, %v87
    %s89 = sld [smem:[#allocation2 + $0x3f]]
    %v90 = vstv %s89
    %v91 = vmul.f32 %v74, %v90
    %s92 = sld [smem:[#allocation2 + $0x48]]
    %v93 = vstv %s92
    %v94 = vmul.f32 %v74, %v93
    %s95 = sld [smem:[#allocation2 + $0x1b]]
    %v96 = vstv %s95
    %v97 = vmul.f32 %v76, %v96
    %v98 = vadd.f32 %v79, %v97
    %s99 = sld [smem:[#allocation2 + $0x24]]
    %v100 = vstv %s99
    %v101 = vmul.f32 %v76, %v100
    %v102 = vadd.f32 %v82, %v101
    %s103 = sld [smem:[#allocation2 + $0x2d]]
    %v104 = vstv %s103
    %v105 = vmul.f32 %v76, %v104
    %v106 = vadd.f32 %v85, %v105
    %s107 = sld [smem:[#allocation2 + $0x51]]
    %v108 = vstv %s107
    %v109 = vmul.f32 %v76, %v108
    %v110 = vadd.f32 %v88, %v109
    %s111 = sld [smem:[#allocation2 + $0x5a]]
    %v112 = vstv %s111
    %v113 = vmul.f32 %v76, %v112
    %v114 = vadd.f32 %v91, %v113
    %s115 = sld [smem:[#allocation2 + $0x63]]
    %v116 = vstv %s115
    %v117 = vmul.f32 %v76, %v116
    %v118 = vadd.f32 %v94, %v117
    %s119 = sld [smem:[#allocation2 + $0x1]]
    %v120 = vstv %s119
    %v121 = vmul.f32 %v74, %v120
    %123 = vrot.lane.b32.xlu0 %v121, 127
    %v124 = vpop.permute.xlu0 %123
    %v126 = vadd.f32 %v98, %v124
    %s127 = sld [smem:[#allocation2 + $0xa]]
    %v128 = vstv %s127
    %v129 = vmul.f32 %v74, %v128
    %131 = vrot.lane.b32.xlu0 %v129, 127
    %v132 = vpop.permute.xlu0 %131
    %v134 = vadd.f32 %v102, %v132
    %s135 = sld [smem:[#allocation2 + $0x13]]
    %v136 = vstv %s135
    %v137 = vmul.f32 %v74, %v136
    %139 = vrot.lane.b32.xlu0 %v137, 127
    %v140 = vpop.permute.xlu0 %139
    %v142 = vadd.f32 %v106, %v140
    %s143 = sld [smem:[#allocation2 + $0x37]]
    %v144 = vstv %s143
    %v145 = vmul.f32 %v74, %v144
    %147 = vrot.lane.b32.xlu0 %v145, 127
    %v148 = vpop.permute.xlu0 %147
    %v150 = vadd.f32 %v110, %v148
    %s151 = sld [smem:[#allocation2 + $0x40]]
    %v152 = vstv %s151
    %v153 = vmul.f32 %v74, %v152
    %155 = vrot.lane.b32.xlu0 %v153, 127
    %v156 = vpop.permute.xlu0 %155
    %v158 = vadd.f32 %v114, %v156
    %s159 = sld [smem:[#allocation2 + $0x49]]
    %v160 = vstv %s159
    %v161 = vmul.f32 %v74, %v160
    %163 = vrot.lane.b32.xlu0 %v161, 127
    %v164 = vpop.permute.xlu0 %163
    %v166 = vadd.f32 %v118, %v164
    %s167 = sld [smem:[#allocation2 + $0x1c]]
    %v168 = vstv %s167
    %v169 = vmul.f32 %v76, %v168
    %171 = vrot.lane.b32.xlu0 %v169, 127
    %v172 = vpop.permute.xlu0 %171
    %v174 = vadd.f32 %v126, %v172
    %s175 = sld [smem:[#allocation2 + $0x25]]
    %v176 = vstv %s175
    %v177 = vmul.f32 %v76, %v176
    %179 = vrot.lane.b32.xlu0 %v177, 127
    %v180 = vpop.permute.xlu0 %179
    %v182 = vadd.f32 %v134, %v180
    %s183 = sld [smem:[#allocation2 + $0x2e]]
    %v184 = vstv %s183
    %v185 = vmul.f32 %v76, %v184
    %187 = vrot.lane.b32.xlu0 %v185, 127
    %v188 = vpop.permute.xlu0 %187
    %v190 = vadd.f32 %v142, %v188
    %s191 = sld [smem:[#allocation2 + $0x52]]
    %v192 = vstv %s191
    %v193 = vmul.f32 %v76, %v192
    %195 = vrot.lane.b32.xlu0 %v193, 127
    %v196 = vpop.permute.xlu0 %195
    %v198 = vadd.f32 %v150, %v196
    %s199 = sld [smem:[#allocation2 + $0x5b]]
    %v200 = vstv %s199
    %v201 = vmul.f32 %v76, %v200
    %203 = vrot.lane.b32.xlu0 %v201, 127
    %v204 = vpop.permute.xlu0 %203
    %v206 = vadd.f32 %v158, %v204
    %s207 = sld [smem:[#allocation2 + $0x64]]
    %v208 = vstv %s207
    %v209 = vmul.f32 %v76, %v208
    %211 = vrot.lane.b32.xlu0 %v209, 127
    %v212 = vpop.permute.xlu0 %211
    %v214 = vadd.f32 %v166, %v212
    %s215 = sld [smem:[#allocation2 + $0x2]]
    %v216 = vstv %s215
    %v217 = vmul.f32 %v74, %v216
    %219 = vrot.lane.b32.xlu0 %v217, 126
    %v220 = vpop.permute.xlu0 %219
    %v222 = vadd.f32 %v174, %v220
    %s223 = sld [smem:[#allocation2 + $0xb]]
    %v224 = vstv %s223
    %v225 = vmul.f32 %v74, %v224
    %227 = vrot.lane.b32.xlu0 %v225, 126
    %v228 = vpop.permute.xlu0 %227
    %v230 = vadd.f32 %v182, %v228
    %s231 = sld [smem:[#allocation2 + $0x14]]
    %v232 = vstv %s231
    %v233 = vmul.f32 %v74, %v232
    %235 = vrot.lane.b32.xlu0 %v233, 126
    %v236 = vpop.permute.xlu0 %235
    %v238 = vadd.f32 %v190, %v236
    %s239 = sld [smem:[#allocation2 + $0x38]]
    %v240 = vstv %s239
    %v241 = vmul.f32 %v74, %v240
    %243 = vrot.lane.b32.xlu0 %v241, 126
    %v244 = vpop.permute.xlu0 %243
    %v246 = vadd.f32 %v198, %v244
    %s247 = sld [smem:[#allocation2 + $0x41]]
    %v248 = vstv %s247
    %v249 = vmul.f32 %v74, %v248
    %251 = vrot.lane.b32.xlu0 %v249, 126
    %v252 = vpop.permute.xlu0 %251
    %v254 = vadd.f32 %v206, %v252
    %s255 = sld [smem:[#allocation2 + $0x4a]]
    %v256 = vstv %s255
    %v257 = vmul.f32 %v74, %v256
    %259 = vrot.lane.b32.xlu0 %v257, 126
    %v260 = vpop.permute.xlu0 %259
    %v262 = vadd.f32 %v214, %v260
    %s263 = sld [smem:[#allocation2 + $0x1d]]
    %v264 = vstv %s263
    %v265 = vmul.f32 %v76, %v264
    %267 = vrot.lane.b32.xlu0 %v265, 126
    %v268 = vpop.permute.xlu0 %267
    %v270 = vadd.f32 %v222, %v268
    %s271 = sld [smem:[#allocation2 + $0x26]]
    %v272 = vstv %s271
    %v273 = vmul.f32 %v76, %v272
    %275 = vrot.lane.b32.xlu0 %v273, 126
    %v276 = vpop.permute.xlu0 %275
    %v278 = vadd.f32 %v230, %v276
    %s279 = sld [smem:[#allocation2 + $0x2f]]
    %v280 = vstv %s279
    %v281 = vmul.f32 %v76, %v280
    %283 = vrot.lane.b32.xlu0 %v281, 126
    %v284 = vpop.permute.xlu0 %283
    %v286 = vadd.f32 %v238, %v284
    %s287 = sld [smem:[#allocation2 + $0x53]]
    %v288 = vstv %s287
    %v289 = vmul.f32 %v76, %v288
    %291 = vrot.lane.b32.xlu0 %v289, 126
    %v292 = vpop.permute.xlu0 %291
    %v294 = vadd.f32 %v246, %v292
    %s295 = sld [smem:[#allocation2 + $0x5c]]
    %v296 = vstv %s295
    %v297 = vmul.f32 %v76, %v296
    %299 = vrot.lane.b32.xlu0 %v297, 126
    %v300 = vpop.permute.xlu0 %299
    %v302 = vadd.f32 %v254, %v300
    %s303 = sld [smem:[#allocation2 + $0x65]]
    %v304 = vstv %s303
    %v305 = vmul.f32 %v76, %v304
    %307 = vrot.lane.b32.xlu0 %v305, 126
    %v308 = vpop.permute.xlu0 %307
    %v310 = vadd.f32 %v262, %v308
    %s311 = sld [smem:[#allocation2 + $0x3]]
    %v312 = vstv %s311
    %v313 = vmul.f32 %v74, %v312
    %315 = vrot.lane.b32.xlu0 %v313, 120
    %v316 = vpop.permute.xlu0 %315
    %v318 = vadd.f32 %v270, %v316
    %s319 = sld [smem:[#allocation2 + $0xc]]
    %v320 = vstv %s319
    %v321 = vmul.f32 %v74, %v320
    %323 = vrot.lane.b32.xlu0 %v321, 120
    %v324 = vpop.permute.xlu0 %323
    %v326 = vadd.f32 %v278, %v324
    %s327 = sld [smem:[#allocation2 + $0x15]]
    %v328 = vstv %s327
    %v329 = vmul.f32 %v74, %v328
    %331 = vrot.lane.b32.xlu0 %v329, 120
    %v332 = vpop.permute.xlu0 %331
    %v334 = vadd.f32 %v286, %v332
    %s335 = sld [smem:[#allocation2 + $0x39]]
    %v336 = vstv %s335
    %v337 = vmul.f32 %v74, %v336
    %339 = vrot.lane.b32.xlu0 %v337, 120
    %v340 = vpop.permute.xlu0 %339
    %v342 = vadd.f32 %v294, %v340
    %s343 = sld [smem:[#allocation2 + $0x42]]
    %v344 = vstv %s343
    %v345 = vmul.f32 %v74, %v344
    %347 = vrot.lane.b32.xlu0 %v345, 120
    %v348 = vpop.permute.xlu0 %347
    %v350 = vadd.f32 %v302, %v348
    %s351 = sld [smem:[#allocation2 + $0x4b]]
    %v352 = vstv %s351
    %v353 = vmul.f32 %v74, %v352
    %355 = vrot.lane.b32.xlu0 %v353, 120
    %v356 = vpop.permute.xlu0 %355
    %v358 = vadd.f32 %v310, %v356
    %s359 = sld [smem:[#allocation2 + $0x1e]]
    %v360 = vstv %s359
    %v361 = vmul.f32 %v76, %v360
    %363 = vrot.lane.b32.xlu0 %v361, 120
    %v364 = vpop.permute.xlu0 %363
    %v366 = vadd.f32 %v318, %v364
    %s367 = sld [smem:[#allocation2 + $0x27]]
    %v368 = vstv %s367
    %v369 = vmul.f32 %v76, %v368
    %371 = vrot.lane.b32.xlu0 %v369, 120
    %v372 = vpop.permute.xlu0 %371
    %v374 = vadd.f32 %v326, %v372
    %s375 = sld [smem:[#allocation2 + $0x30]]
    %v376 = vstv %s375
    %v377 = vmul.f32 %v76, %v376
    %379 = vrot.lane.b32.xlu0 %v377, 120
    %v380 = vpop.permute.xlu0 %379
    %v382 = vadd.f32 %v334, %v380
    %s383 = sld [smem:[#allocation2 + $0x54]]
    %v384 = vstv %s383
    %v385 = vmul.f32 %v76, %v384
    %387 = vrot.lane.b32.xlu0 %v385, 120
    %v388 = vpop.permute.xlu0 %387
    %v390 = vadd.f32 %v342, %v388
    %s391 = sld [smem:[#allocation2 + $0x5d]]
    %v392 = vstv %s391
    %v393 = vmul.f32 %v76, %v392
    %395 = vrot.lane.b32.xlu0 %v393, 120
    %v396 = vpop.permute.xlu0 %395
    %v398 = vadd.f32 %v350, %v396
    %s399 = sld [smem:[#allocation2 + $0x66]]
    %v400 = vstv %s399
    %v401 = vmul.f32 %v76, %v400
    %403 = vrot.lane.b32.xlu0 %v401, 120
    %v404 = vpop.permute.xlu0 %403
    %v406 = vadd.f32 %v358, %v404
    %s407 = sld [smem:[#allocation2 + $0x4]]
    %v408 = vstv %s407
    %v409 = vmul.f32 %v74, %v408
    %411 = vrot.lane.b32.xlu0 %v409, 119
    %v412 = vpop.permute.xlu0 %411
    %v414 = vadd.f32 %v366, %v412
    %s415 = sld [smem:[#allocation2 + $0xd]]
    %v416 = vstv %s415
    %v417 = vmul.f32 %v74, %v416
    %419 = vrot.lane.b32.xlu0 %v417, 119
    %v420 = vpop.permute.xlu0 %419
    %v422 = vadd.f32 %v374, %v420
    %s423 = sld [smem:[#allocation2 + $0x16]]
    %v424 = vstv %s423
    %v425 = vmul.f32 %v74, %v424
    %427 = vrot.lane.b32.xlu0 %v425, 119
    %v428 = vpop.permute.xlu0 %427
    %v430 = vadd.f32 %v382, %v428
    %s431 = sld [smem:[#allocation2 + $0x3a]]
    %v432 = vstv %s431
    %v433 = vmul.f32 %v74, %v432
    %435 = vrot.lane.b32.xlu0 %v433, 119
    %v436 = vpop.permute.xlu0 %435
    %v438 = vadd.f32 %v390, %v436
    %s439 = sld [smem:[#allocation2 + $0x43]]
    %v440 = vstv %s439
    %v441 = vmul.f32 %v74, %v440
    %443 = vrot.lane.b32.xlu0 %v441, 119
    %v444 = vpop.permute.xlu0 %443
    %v446 = vadd.f32 %v398, %v444
    %s447 = sld [smem:[#allocation2 + $0x4c]]
    %v448 = vstv %s447
    %v449 = vmul.f32 %v74, %v448
    %451 = vrot.lane.b32.xlu0 %v449, 119
    %v452 = vpop.permute.xlu0 %451
    %v454 = vadd.f32 %v406, %v452
    %s455 = sld [smem:[#allocation2 + $0x1f]]
    %v456 = vstv %s455
    %v457 = vmul.f32 %v76, %v456
    %459 = vrot.lane.b32.xlu0 %v457, 119
    %v460 = vpop.permute.xlu0 %459
    %v462 = vadd.f32 %v414, %v460
    %s463 = sld [smem:[#allocation2 + $0x28]]
    %v464 = vstv %s463
    %v465 = vmul.f32 %v76, %v464
    %467 = vrot.lane.b32.xlu0 %v465, 119
    %v468 = vpop.permute.xlu0 %467
    %v470 = vadd.f32 %v422, %v468
    %s471 = sld [smem:[#allocation2 + $0x31]]
    %v472 = vstv %s471
    %v473 = vmul.f32 %v76, %v472
    %475 = vrot.lane.b32.xlu0 %v473, 119
    %v476 = vpop.permute.xlu0 %475
    %v478 = vadd.f32 %v430, %v476
    %s479 = sld [smem:[#allocation2 + $0x55]]
    %v480 = vstv %s479
    %v481 = vmul.f32 %v76, %v480
    %483 = vrot.lane.b32.xlu0 %v481, 119
    %v484 = vpop.permute.xlu0 %483
    %v486 = vadd.f32 %v438, %v484
    %s487 = sld [smem:[#allocation2 + $0x5e]]
    %v488 = vstv %s487
    %v489 = vmul.f32 %v76, %v488
    %491 = vrot.lane.b32.xlu0 %v489, 119
    %v492 = vpop.permute.xlu0 %491
    %v494 = vadd.f32 %v446, %v492
    %s495 = sld [smem:[#allocation2 + $0x67]]
    %v496 = vstv %s495
    %v497 = vmul.f32 %v76, %v496
    %499 = vrot.lane.b32.xlu0 %v497, 119
    %v500 = vpop.permute.xlu0 %499
    %v502 = vadd.f32 %v454, %v500
    %s503 = sld [smem:[#allocation2 + $0x5]]
    %v504 = vstv %s503
    %v505 = vmul.f32 %v74, %v504
    %507 = vrot.lane.b32.xlu0 %v505, 118
    %v508 = vpop.permute.xlu0 %507
    %v510 = vadd.f32 %v462, %v508
    %s511 = sld [smem:[#allocation2 + $0xe]]
    %v512 = vstv %s511
    %v513 = vmul.f32 %v74, %v512
    %515 = vrot.lane.b32.xlu0 %v513, 118
    %v516 = vpop.permute.xlu0 %515
    %v518 = vadd.f32 %v470, %v516
    %s519 = sld [smem:[#allocation2 + $0x17]]
    %v520 = vstv %s519
    %v521 = vmul.f32 %v74, %v520
    %523 = vrot.lane.b32.xlu0 %v521, 118
    %v524 = vpop.permute.xlu0 %523
    %v526 = vadd.f32 %v478, %v524
    %s527 = sld [smem:[#allocation2 + $0x3b]]
    %v528 = vstv %s527
    %v529 = vmul.f32 %v74, %v528
    %531 = vrot.lane.b32.xlu0 %v529, 118
    %v532 = vpop.permute.xlu0 %531
    %v534 = vadd.f32 %v486, %v532
    %s535 = sld [smem:[#allocation2 + $0x44]]
    %v536 = vstv %s535
    %v537 = vmul.f32 %v74, %v536
    %539 = vrot.lane.b32.xlu0 %v537, 118
    %v540 = vpop.permute.xlu0 %539
    %v542 = vadd.f32 %v494, %v540
    %s543 = sld [smem:[#allocation2 + $0x4d]]
    %v544 = vstv %s543
    %v545 = vmul.f32 %v74, %v544
    %547 = vrot.lane.b32.xlu0 %v545, 118
    %v548 = vpop.permute.xlu0 %547
    %v550 = vadd.f32 %v502, %v548
    %s551 = sld [smem:[#allocation2 + $0x20]]
    %v552 = vstv %s551
    %v553 = vmul.f32 %v76, %v552
    %555 = vrot.lane.b32.xlu0 %v553, 118
    %v556 = vpop.permute.xlu0 %555
    %v558 = vadd.f32 %v510, %v556
    %s559 = sld [smem:[#allocation2 + $0x29]]
    %v560 = vstv %s559
    %v561 = vmul.f32 %v76, %v560
    %563 = vrot.lane.b32.xlu0 %v561, 118
    %v564 = vpop.permute.xlu0 %563
    %v566 = vadd.f32 %v518, %v564
    %s567 = sld [smem:[#allocation2 + $0x32]]
    %v568 = vstv %s567
    %v569 = vmul.f32 %v76, %v568
    %571 = vrot.lane.b32.xlu0 %v569, 118
    %v572 = vpop.permute.xlu0 %571
    %v574 = vadd.f32 %v526, %v572
    %s575 = sld [smem:[#allocation2 + $0x56]]
    %v576 = vstv %s575
    %v577 = vmul.f32 %v76, %v576
    %579 = vrot.lane.b32.xlu0 %v577, 118
    %v580 = vpop.permute.xlu0 %579
    %v582 = vadd.f32 %v534, %v580
    %s583 = sld [smem:[#allocation2 + $0x5f]]
    %v584 = vstv %s583
    %v585 = vmul.f32 %v76, %v584
    %587 = vrot.lane.b32.xlu0 %v585, 118
    %v588 = vpop.permute.xlu0 %587
    %v590 = vadd.f32 %v542, %v588
    %s591 = sld [smem:[#allocation2 + $0x68]]
    %v592 = vstv %s591
    %v593 = vmul.f32 %v76, %v592
    %595 = vrot.lane.b32.xlu0 %v593, 118
    %v596 = vpop.permute.xlu0 %595
    %v598 = vadd.f32 %v550, %v596
    %s599 = sld [smem:[#allocation2 + $0x6]]
    %v600 = vstv %s599
    %v601 = vmul.f32 %v74, %v600
    %603 = vrot.lane.b32.xlu0 %v601, 112
    %v604 = vpop.permute.xlu0 %603
    %v606 = vadd.f32 %v558, %v604
    %s607 = sld [smem:[#allocation2 + $0xf]]
    %v608 = vstv %s607
    %v609 = vmul.f32 %v74, %v608
    %611 = vrot.lane.b32.xlu0 %v609, 112
    %v612 = vpop.permute.xlu0 %611
    %v614 = vadd.f32 %v566, %v612
    %s615 = sld [smem:[#allocation2 + $0x18]]
    %v616 = vstv %s615
    %v617 = vmul.f32 %v74, %v616
    %619 = vrot.lane.b32.xlu0 %v617, 112
    %v620 = vpop.permute.xlu0 %619
    %v622 = vadd.f32 %v574, %v620
    %s623 = sld [smem:[#allocation2 + $0x3c]]
    %v624 = vstv %s623
    %v625 = vmul.f32 %v74, %v624
    %627 = vrot.lane.b32.xlu0 %v625, 112
    %v628 = vpop.permute.xlu0 %627
    %v630 = vadd.f32 %v582, %v628
    %s631 = sld [smem:[#allocation2 + $0x45]]
    %v632 = vstv %s631
    %v633 = vmul.f32 %v74, %v632
    %635 = vrot.lane.b32.xlu0 %v633, 112
    %v636 = vpop.permute.xlu0 %635
    %v638 = vadd.f32 %v590, %v636
    %s639 = sld [smem:[#allocation2 + $0x4e]]
    %v640 = vstv %s639
    %v641 = vmul.f32 %v74, %v640
    %643 = vrot.lane.b32.xlu0 %v641, 112
    %v644 = vpop.permute.xlu0 %643
    %v646 = vadd.f32 %v598, %v644
    %s647 = sld [smem:[#allocation2 + $0x21]]
    %v648 = vstv %s647
    %v649 = vmul.f32 %v76, %v648
    %651 = vrot.lane.b32.xlu0 %v649, 112
    %v652 = vpop.permute.xlu0 %651
    %v654 = vadd.f32 %v606, %v652
    %s655 = sld [smem:[#allocation2 + $0x2a]]
    %v656 = vstv %s655
    %v657 = vmul.f32 %v76, %v656
    %659 = vrot.lane.b32.xlu0 %v657, 112
    %v660 = vpop.permute.xlu0 %659
    %v662 = vadd.f32 %v614, %v660
    %s663 = sld [smem:[#allocation2 + $0x33]]
    %v664 = vstv %s663
    %v665 = vmul.f32 %v76, %v664
    %667 = vrot.lane.b32.xlu0 %v665, 112
    %v668 = vpop.permute.xlu0 %667
    %v670 = vadd.f32 %v622, %v668
    %s671 = sld [smem:[#allocation2 + $0x57]]
    %v672 = vstv %s671
    %v673 = vmul.f32 %v76, %v672
    %675 = vrot.lane.b32.xlu0 %v673, 112
    %v676 = vpop.permute.xlu0 %675
    %v678 = vadd.f32 %v630, %v676
    %s679 = sld [smem:[#allocation2 + $0x60]]
    %v680 = vstv %s679
    %v681 = vmul.f32 %v76, %v680
    %683 = vrot.lane.b32.xlu0 %v681, 112
    %v684 = vpop.permute.xlu0 %683
    %v686 = vadd.f32 %v638, %v684
    %s687 = sld [smem:[#allocation2 + $0x69]]
    %v688 = vstv %s687
    %v689 = vmul.f32 %v76, %v688
    %691 = vrot.lane.b32.xlu0 %v689, 112
    %v692 = vpop.permute.xlu0 %691
    %v694 = vadd.f32 %v646, %v692
    %s695 = sld [smem:[#allocation2 + $0x7]]
    %v696 = vstv %s695
    %v697 = vmul.f32 %v74, %v696
    %699 = vrot.lane.b32.xlu0 %v697, 111
    %v700 = vpop.permute.xlu0 %699
    %v702 = vadd.f32 %v654, %v700
    %s703 = sld [smem:[#allocation2 + $0x10]]
    %v704 = vstv %s703
    %v705 = vmul.f32 %v74, %v704
    %707 = vrot.lane.b32.xlu0 %v705, 111
    %v708 = vpop.permute.xlu0 %707
    %v710 = vadd.f32 %v662, %v708
    %s711 = sld [smem:[#allocation2 + $0x19]]
    %v712 = vstv %s711
    %v713 = vmul.f32 %v74, %v712
    %715 = vrot.lane.b32.xlu0 %v713, 111
    %v716 = vpop.permute.xlu0 %715
    %v718 = vadd.f32 %v670, %v716
    %s719 = sld [smem:[#allocation2 + $0x3d]]
    %v720 = vstv %s719
    %v721 = vmul.f32 %v74, %v720
    %723 = vrot.lane.b32.xlu0 %v721, 111
    %v724 = vpop.permute.xlu0 %723
    %v726 = vadd.f32 %v678, %v724
    %s727 = sld [smem:[#allocation2 + $0x46]]
    %v728 = vstv %s727
    %v729 = vmul.f32 %v74, %v728
    %731 = vrot.lane.b32.xlu0 %v729, 111
    %v732 = vpop.permute.xlu0 %731
    %v734 = vadd.f32 %v686, %v732
    %s735 = sld [smem:[#allocation2 + $0x4f]]
    %v736 = vstv %s735
    %v737 = vmul.f32 %v74, %v736
    %739 = vrot.lane.b32.xlu0 %v737, 111
    %v740 = vpop.permute.xlu0 %739
    %v742 = vadd.f32 %v694, %v740
    %s743 = sld [smem:[#allocation2 + $0x22]]
    %v744 = vstv %s743
    %v745 = vmul.f32 %v76, %v744
    %747 = vrot.lane.b32.xlu0 %v745, 111
    %v748 = vpop.permute.xlu0 %747
    %v750 = vadd.f32 %v702, %v748
    %s751 = sld [smem:[#allocation2 + $0x2b]]
    %v752 = vstv %s751
    %v753 = vmul.f32 %v76, %v752
    %755 = vrot.lane.b32.xlu0 %v753, 111
    %v756 = vpop.permute.xlu0 %755
    %v758 = vadd.f32 %v710, %v756
    %s759 = sld [smem:[#allocation2 + $0x34]]
    %v760 = vstv %s759
    %v761 = vmul.f32 %v76, %v760
    %763 = vrot.lane.b32.xlu0 %v761, 111
    %v764 = vpop.permute.xlu0 %763
    %v766 = vadd.f32 %v718, %v764
    %s767 = sld [smem:[#allocation2 + $0x58]]
    %v768 = vstv %s767
    %v769 = vmul.f32 %v76, %v768
    %771 = vrot.lane.b32.xlu0 %v769, 111
    %v772 = vpop.permute.xlu0 %771
    %v774 = vadd.f32 %v726, %v772
    %s775 = sld [smem:[#allocation2 + $0x61]]
    %v776 = vstv %s775
    %v777 = vmul.f32 %v76, %v776
    %779 = vrot.lane.b32.xlu0 %v777, 111
    %v780 = vpop.permute.xlu0 %779
    %v782 = vadd.f32 %v734, %v780
    %s783 = sld [smem:[#allocation2 + $0x6a]]
    %v784 = vstv %s783
    %v785 = vmul.f32 %v76, %v784
    %787 = vrot.lane.b32.xlu0 %v785, 111
    %v788 = vpop.permute.xlu0 %787
    %v790 = vadd.f32 %v742, %v788
    %s791 = sld [smem:[#allocation2 + $0x8]]
    %v792 = vstv %s791
    %v793 = vmul.f32 %v74, %v792
    %795 = vrot.lane.b32.xlu0 %v793, 110
    %v796 = vpop.permute.xlu0 %795
    %v798 = vadd.f32 %v750, %v796
    %s799 = sld [smem:[#allocation2 + $0x11]]
    %v800 = vstv %s799
    %v801 = vmul.f32 %v74, %v800
    %803 = vrot.lane.b32.xlu0 %v801, 110
    %v804 = vpop.permute.xlu0 %803
    %v806 = vadd.f32 %v758, %v804
    %s807 = sld [smem:[#allocation2 + $0x1a]]
    %v808 = vstv %s807
    %v809 = vmul.f32 %v74, %v808
    %811 = vrot.lane.b32.xlu0 %v809, 110
    %v812 = vpop.permute.xlu0 %811
    %v814 = vadd.f32 %v766, %v812
    %s815 = sld [smem:[#allocation2 + $0x3e]]
    %v816 = vstv %s815
    %v817 = vmul.f32 %v74, %v816
    %819 = vrot.lane.b32.xlu0 %v817, 110
    %v820 = vpop.permute.xlu0 %819
    %v822 = vadd.f32 %v774, %v820
    %s823 = sld [smem:[#allocation2 + $0x47]]
    %v824 = vstv %s823
    %v825 = vmul.f32 %v74, %v824
    %827 = vrot.lane.b32.xlu0 %v825, 110
    %v828 = vpop.permute.xlu0 %827
    %v830 = vadd.f32 %v782, %v828
    %s831 = sld [smem:[#allocation2 + $0x50]]
    %v832 = vstv %s831
    %v833 = vmul.f32 %v74, %v832
    %835 = vrot.lane.b32.xlu0 %v833, 110
    %v836 = vpop.permute.xlu0 %835
    %v838 = vadd.f32 %v790, %v836
    %s839 = sld [smem:[#allocation2 + $0x23]]
    %v840 = vstv %s839
    %v841 = vmul.f32 %v76, %v840
    %843 = vrot.lane.b32.xlu0 %v841, 110
    %v844 = vpop.permute.xlu0 %843
    %v846 = vadd.f32 %v798, %v844
    %s847 = sld [smem:[#allocation2 + $0x2c]]
    %v848 = vstv %s847
    %v849 = vmul.f32 %v76, %v848
    %851 = vrot.lane.b32.xlu0 %v849, 110
    %v852 = vpop.permute.xlu0 %851
    %v854 = vadd.f32 %v806, %v852
    %s855 = sld [smem:[#allocation2 + $0x35]]
    %v856 = vstv %s855
    %v857 = vmul.f32 %v76, %v856
    %859 = vrot.lane.b32.xlu0 %v857, 110
    %v860 = vpop.permute.xlu0 %859
    %v862 = vadd.f32 %v814, %v860
    %s863 = sld [smem:[#allocation2 + $0x59]]
    %v864 = vstv %s863
    %v865 = vmul.f32 %v76, %v864
    %867 = vrot.lane.b32.xlu0 %v865, 110
    %v868 = vpop.permute.xlu0 %867
    %v870 = vadd.f32 %v822, %v868
    %s871 = sld [smem:[#allocation2 + $0x62]]
    %v872 = vstv %s871
    %v873 = vmul.f32 %v76, %v872
    %875 = vrot.lane.b32.xlu0 %v873, 110
    %v876 = vpop.permute.xlu0 %875
    %v878 = vadd.f32 %v830, %v876
    %s879 = sld [smem:[#allocation2 + $0x6b]]
    %v880 = vstv %s879
    %v881 = vmul.f32 %v76, %v880
    %883 = vrot.lane.b32.xlu0 %v881, 110
    %v884 = vpop.permute.xlu0 %883
    %v886 = vadd.f32 %v838, %v884
    %v888 = vrot.slane %v854, 1
    %v890 = vadd.f32 %v846, %v888
    %v892 = vrot.slane %v862, 2
    %v894 = vadd.f32 %v890, %v892
    %v896 = vrot.slane %v878, 1
    %v898 = vadd.f32 %v870, %v896
    %v900 = vrot.slane %v886, 2
    %v902 = vadd.f32 %v898, %v900
    %v903 = vld [vmem:[%s5] sm:$0x3f]
    %s904 = sld [smem:[#allocation6]]
    %s905 = sld [smem:[#allocation7]]
    %v906 = vmul.f32 %v894, %v903
    %vm907 = vcmask 898048
    %v908 = vsel %vm907, %v906, 0.0
    %909 = vadd.xlane.f32.xlu0 %v908
    %v910 = vpop.xlane.xlu0 %909
    %v911 = vrot.slane %v910, 4
    %v912 = vadd.f32 %v910, %v911
    %v913 = vrot.slane %v912, 2
    %v914 = vadd.f32 %v912, %v913
    %v915 = vrot.slane %v914, 1
    %v916 = vadd.f32 %v914, %v915
    %s917 = vtos %v916
    %v918 = vstv %s917
    %v919 = vmul.f32 %v918, 0.0023148148
    %v920 = vmul.f32 %v906, %v894
    %v921 = vsel %vm907, %v920, 0.0
    %922 = vadd.xlane.f32.xlu0 %v921
    %v923 = vpop.xlane.xlu0 %922
    %v924 = vrot.slane %v923, 4
    %v925 = vadd.f32 %v923, %v924
    %v926 = vrot.slane %v925, 2
    %v927 = vadd.f32 %v925, %v926
    %v928 = vrot.slane %v927, 1
    %v929 = vadd.f32 %v927, %v928
    %s930 = vtos %v929
    %v931 = vstv %s930
    %v932 = vmul.f32 %v931, 0.0023148148
    %v933 = vmul.f32 %v919, %v919
    %v934 = vsub.f32 %v932, %v933
    %v935 = vadd.f32 %v934, 1e-05
    %v936 = vrsqrt.pop %v935
    %v937 = vstv %s904
    %v938 = vmul.f32 %v937, %v936
    %v939 = vmul.f32 %v919, %v938
    %v940 = vstv %s905
    %v941 = vsub.f32 %v940, %v939
    %v942 = vmul.f32 %v894, %v938
    %v943 = vadd.f32 %v942, %v941
    %v944 = vmax.f32 %v943, 0.0
    %s945 = sld [smem:[#allocation6 + $0x1]]
    %s946 = sld [smem:[#allocation7 + $0x1]]
    %v947 = vmul.f32 %v902, %v903
    %v948 = vsel %vm907, %v947, 0.0
    %949 = vadd.xlane.f32.xlu0 %v948
    %v950 = vpop.xlane.xlu0 %949
    %v951 = vrot.slane %v950, 4
    %v952 = vadd.f32 %v950, %v951
    %v953 = vrot.slane %v952, 2
    %v954 = vadd.f32 %v952, %v953
    %v955 = vrot.slane %v954, 1
    %v956 = vadd.f32 %v954, %v955
    %s957 = vtos %v956
    %v958 = vstv %s957
    %v959 = vmul.f32 %v958, 0.0023148148
    %v960 = vmul.f32 %v947, %v902
    %v961 = vsel %vm907, %v960, 0.0
    %962 = vadd.xlane.f32.xlu0 %v961
    %v963 = vpop.xlane.xlu0 %962
    %v964 = vrot.slane %v963, 4
    %v965 = vadd.f32 %v963, %v964
    %v966 = vrot.slane %v965, 2
    %v967 = vadd.f32 %v965, %v966
    %v968 = vrot.slane %v967, 1
    %v969 = vadd.f32 %v967, %v968
    %s970 = vtos %v969
    %v971 = vstv %s970
    %v972 = vmul.f32 %v971, 0.0023148148
    %v973 = vmul.f32 %v959, %v959
    %v974 = vsub.f32 %v972, %v973
    %v975 = vadd.f32 %v974, 1e-05
    %v976 = vrsqrt.pop %v975
    %v977 = vstv %s945
    %v978 = vmul.f32 %v977, %v976
    %v979 = vmul.f32 %v959, %v978
    %v980 = vstv %s946
    %v981 = vsub.f32 %v980, %v979
    %v982 = vmul.f32 %v902, %v978
    %v983 = vadd.f32 %v982, %v981
    %v984 = vmax.f32 %v983, 0.0
    %s985 = sld [smem:[#allocation4]]
    %v986 = vstv %s985
    %v987 = vmul.f32 %v944, %v986
    %s988 = sld [smem:[#allocation4 + $0x9]]
    %v989 = vstv %s988
    %v990 = vmul.f32 %v944, %v989
    %s991 = sld [smem:[#allocation4 + $0x12]]
    %v992 = vstv %s991
    %v993 = vmul.f32 %v944, %v992
    %s994 = sld [smem:[#allocation4 + $0x36]]
    %v995 = vstv %s994
    %v996 = vmul.f32 %v944, %v995
    %s997 = sld [smem:[#allocation4 + $0x3f]]
    %v998 = vstv %s997
    %v999 = vmul.f32 %v944, %v998
    %s1000 = sld [smem:[#allocation4 + $0x48]]
    %v1001 = vstv %s1000
    %v1002 = vmul.f32 %v944, %v1001
    %s1003 = sld [smem:[#allocation4 + $0x1b]]
    %v1004 = vstv %s1003
    %v1005 = vmul.f32 %v984, %v1004
    %v1006 = vadd.f32 %v987, %v1005
    %s1007 = sld [smem:[#allocation4 + $0x24]]
    %v1008 = vstv %s1007
    %v1009 = vmul.f32 %v984, %v1008
    %v1010 = vadd.f32 %v990, %v1009
    %s1011 = sld [smem:[#allocation4 + $0x2d]]
    %v1012 = vstv %s1011
    %v1013 = vmul.f32 %v984, %v1012
    %v1014 = vadd.f32 %v993, %v1013
    %s1015 = sld [smem:[#allocation4 + $0x51]]
    %v1016 = vstv %s1015
    %v1017 = vmul.f32 %v984, %v1016
    %v1018 = vadd.f32 %v996, %v1017
    %s1019 = sld [smem:[#allocation4 + $0x5a]]
    %v1020 = vstv %s1019
    %v1021 = vmul.f32 %v984, %v1020
    %v1022 = vadd.f32 %v999, %v1021
    %s1023 = sld [smem:[#allocation4 + $0x63]]
    %v1024 = vstv %s1023
    %v1025 = vmul.f32 %v984, %v1024
    %v1026 = vadd.f32 %v1002, %v1025
    %s1027 = sld [smem:[#allocation4 + $0x1]]
    %v1028 = vstv %s1027
    %v1029 = vmul.f32 %v944, %v1028
    %1031 = vrot.lane.b32.xlu0 %v1029, 127
    %v1032 = vpop.permute.xlu0 %1031
    %v1034 = vadd.f32 %v1006, %v1032
    %s1035 = sld [smem:[#allocation4 + $0xa]]
    %v1036 = vstv %s1035
    %v1037 = vmul.f32 %v944, %v1036
    %1039 = vrot.lane.b32.xlu0 %v1037, 127
    %v1040 = vpop.permute.xlu0 %1039
    %v1042 = vadd.f32 %v1010, %v1040
    %s1043 = sld [smem:[#allocation4 + $0x13]]
    %v1044 = vstv %s1043
    %v1045 = vmul.f32 %v944, %v1044
    %1047 = vrot.lane.b32.xlu0 %v1045, 127
    %v1048 = vpop.permute.xlu0 %1047
    %v1050 = vadd.f32 %v1014, %v1048
    %s1051 = sld [smem:[#allocation4 + $0x37]]
    %v1052 = vstv %s1051
    %v1053 = vmul.f32 %v944, %v1052
    %1055 = vrot.lane.b32.xlu0 %v1053, 127
    %v1056 = vpop.permute.xlu0 %1055
    %v1058 = vadd.f32 %v1018, %v1056
    %s1059 = sld [smem:[#allocation4 + $0x40]]
    %v1060 = vstv %s1059
    %v1061 = vmul.f32 %v944, %v1060
    %1063 = vrot.lane.b32.xlu0 %v1061, 127
    %v1064 = vpop.permute.xlu0 %1063
    %v1066 = vadd.f32 %v1022, %v1064
    %s1067 = sld [smem:[#allocation4 + $0x49]]
    %v1068 = vstv %s1067
    %v1069 = vmul.f32 %v944, %v1068
    %1071 = vrot.lane.b32.xlu0 %v1069, 127
    %v1072 = vpop.permute.xlu0 %1071
    %v1074 = vadd.f32 %v1026, %v1072
    %s1075 = sld [smem:[#allocation4 + $0x1c]]
    %v1076 = vstv %s1075
    %v1077 = vmul.f32 %v984, %v1076
    %1079 = vrot.lane.b32.xlu0 %v1077, 127
    %v1080 = vpop.permute.xlu0 %1079
    %v1082 = vadd.f32 %v1034, %v1080
    %s1083 = sld [smem:[#allocation4 + $0x25]]
    %v1084 = vstv %s1083
    %v1085 = vmul.f32 %v984, %v1084
    %1087 = vrot.lane.b32.xlu0 %v1085, 127
    %v1088 = vpop.permute.xlu0 %1087
    %v1090 = vadd.f32 %v1042, %v1088
    %s1091 = sld [smem:[#allocation4 + $0x2e]]
    %v1092 = vstv %s1091
    %v1093 = vmul.f32 %v984, %v1092
    %1095 = vrot.lane.b32.xlu0 %v1093, 127
    %v1096 = vpop.permute.xlu0 %1095
    %v1098 = vadd.f32 %v1050, %v1096
    %s1099 = sld [smem:[#allocation4 + $0x52]]
    %v1100 = vstv %s1099
    %v1101 = vmul.f32 %v984, %v1100
    %1103 = vrot.lane.b32.xlu0 %v1101, 127
    %v1104 = vpop.permute.xlu0 %1103
    %v1106 = vadd.f32 %v1058, %v1104
    %s1107 = sld [smem:[#allocation4 + $0x5b]]
    %v1108 = vstv %s1107
    %v1109 = vmul.f32 %v984, %v1108
    %1111 = vrot.lane.b32.xlu0 %v1109, 127
    %v1112 = vpop.permute.xlu0 %1111
    %v1114 = vadd.f32 %v1066, %v1112
    %s1115 = sld [smem:[#allocation4 + $0x64]]
    %v1116 = vstv %s1115
    %v1117 = vmul.f32 %v984, %v1116
    %1119 = vrot.lane.b32.xlu0 %v1117, 127
    %v1120 = vpop.permute.xlu0 %1119
    %v1122 = vadd.f32 %v1074, %v1120
    %s1123 = sld [smem:[#allocation4 + $0x2]]
    %v1124 = vstv %s1123
    %v1125 = vmul.f32 %v944, %v1124
    %1127 = vrot.lane.b32.xlu0 %v1125, 126
    %v1128 = vpop.permute.xlu0 %1127
    %v1130 = vadd.f32 %v1082, %v1128
    %s1131 = sld [smem:[#allocation4 + $0xb]]
    %v1132 = vstv %s1131
    %v1133 = vmul.f32 %v944, %v1132
    %1135 = vrot.lane.b32.xlu0 %v1133, 126
    %v1136 = vpop.permute.xlu0 %1135
    %v1138 = vadd.f32 %v1090, %v1136
    %s1139 = sld [smem:[#allocation4 + $0x14]]
    %v1140 = vstv %s1139
    %v1141 = vmul.f32 %v944, %v1140
    %1143 = vrot.lane.b32.xlu0 %v1141, 126
    %v1144 = vpop.permute.xlu0 %1143
    %v1146 = vadd.f32 %v1098, %v1144
    %s1147 = sld [smem:[#allocation4 + $0x38]]
    %v1148 = vstv %s1147
    %v1149 = vmul.f32 %v944, %v1148
    %1151 = vrot.lane.b32.xlu0 %v1149, 126
    %v1152 = vpop.permute.xlu0 %1151
    %v1154 = vadd.f32 %v1106, %v1152
    %s1155 = sld [smem:[#allocation4 + $0x41]]
    %v1156 = vstv %s1155
    %v1157 = vmul.f32 %v944, %v1156
    %1159 = vrot.lane.b32.xlu0 %v1157, 126
    %v1160 = vpop.permute.xlu0 %1159
    %v1162 = vadd.f32 %v1114, %v1160
    %s1163 = sld [smem:[#allocation4 + $0x4a]]
    %v1164 = vstv %s1163
    %v1165 = vmul.f32 %v944, %v1164
    %1167 = vrot.lane.b32.xlu0 %v1165, 126
    %v1168 = vpop.permute.xlu0 %1167
    %v1170 = vadd.f32 %v1122, %v1168
    %s1171 = sld [smem:[#allocation4 + $0x1d]]
    %v1172 = vstv %s1171
    %v1173 = vmul.f32 %v984, %v1172
    %1175 = vrot.lane.b32.xlu0 %v1173, 126
    %v1176 = vpop.permute.xlu0 %1175
    %v1178 = vadd.f32 %v1130, %v1176
    %s1179 = sld [smem:[#allocation4 + $0x26]]
    %v1180 = vstv %s1179
    %v1181 = vmul.f32 %v984, %v1180
    %1183 = vrot.lane.b32.xlu0 %v1181, 126
    %v1184 = vpop.permute.xlu0 %1183
    %v1186 = vadd.f32 %v1138, %v1184
    %s1187 = sld [smem:[#allocation4 + $0x2f]]
    %v1188 = vstv %s1187
    %v1189 = vmul.f32 %v984, %v1188
    %1191 = vrot.lane.b32.xlu0 %v1189, 126
    %v1192 = vpop.permute.xlu0 %1191
    %v1194 = vadd.f32 %v1146, %v1192
    %s1195 = sld [smem:[#allocation4 + $0x53]]
    %v1196 = vstv %s1195
    %v1197 = vmul.f32 %v984, %v1196
    %1199 = vrot.lane.b32.xlu0 %v1197, 126
    %v1200 = vpop.permute.xlu0 %1199
    %v1202 = vadd.f32 %v1154, %v1200
    %s1203 = sld [smem:[#allocation4 + $0x5c]]
    %v1204 = vstv %s1203
    %v1205 = vmul.f32 %v984, %v1204
    %1207 = vrot.lane.b32.xlu0 %v1205, 126
    %v1208 = vpop.permute.xlu0 %1207
    %v1210 = vadd.f32 %v1162, %v1208
    %s1211 = sld [smem:[#allocation4 + $0x65]]
    %v1212 = vstv %s1211
    %v1213 = vmul.f32 %v984, %v1212
    %1215 = vrot.lane.b32.xlu0 %v1213, 126
    %v1216 = vpop.permute.xlu0 %1215
    %v1218 = vadd.f32 %v1170, %v1216
    %s1219 = sld [smem:[#allocation4 + $0x3]]
    %v1220 = vstv %s1219
    %v1221 = vmul.f32 %v944, %v1220
    %1223 = vrot.lane.b32.xlu0 %v1221, 120
    %v1224 = vpop.permute.xlu0 %1223
    %v1226 = vadd.f32 %v1178, %v1224
    %s1227 = sld [smem:[#allocation4 + $0xc]]
    %v1228 = vstv %s1227
    %v1229 = vmul.f32 %v944, %v1228
    %1231 = vrot.lane.b32.xlu0 %v1229, 120
    %v1232 = vpop.permute.xlu0 %1231
    %v1234 = vadd.f32 %v1186, %v1232
    %s1235 = sld [smem:[#allocation4 + $0x15]]
    %v1236 = vstv %s1235
    %v1237 = vmul.f32 %v944, %v1236
    %1239 = vrot.lane.b32.xlu0 %v1237, 120
    %v1240 = vpop.permute.xlu0 %1239
    %v1242 = vadd.f32 %v1194, %v1240
    %s1243 = sld [smem:[#allocation4 + $0x39]]
    %v1244 = vstv %s1243
    %v1245 = vmul.f32 %v944, %v1244
    %1247 = vrot.lane.b32.xlu0 %v1245, 120
    %v1248 = vpop.permute.xlu0 %1247
    %v1250 = vadd.f32 %v1202, %v1248
    %s1251 = sld [smem:[#allocation4 + $0x42]]
    %v1252 = vstv %s1251
    %v1253 = vmul.f32 %v944, %v1252
    %1255 = vrot.lane.b32.xlu0 %v1253, 120
    %v1256 = vpop.permute.xlu0 %1255
    %v1258 = vadd.f32 %v1210, %v1256
    %s1259 = sld [smem:[#allocation4 + $0x4b]]
    %v1260 = vstv %s1259
    %v1261 = vmul.f32 %v944, %v1260
    %1263 = vrot.lane.b32.xlu0 %v1261, 120
    %v1264 = vpop.permute.xlu0 %1263
    %v1266 = vadd.f32 %v1218, %v1264
    %s1267 = sld [smem:[#allocation4 + $0x1e]]
    %v1268 = vstv %s1267
    %v1269 = vmul.f32 %v984, %v1268
    %1271 = vrot.lane.b32.xlu0 %v1269, 120
    %v1272 = vpop.permute.xlu0 %1271
    %v1274 = vadd.f32 %v1226, %v1272
    %s1275 = sld [smem:[#allocation4 + $0x27]]
    %v1276 = vstv %s1275
    %v1277 = vmul.f32 %v984, %v1276
    %1279 = vrot.lane.b32.xlu0 %v1277, 120
    %v1280 = vpop.permute.xlu0 %1279
    %v1282 = vadd.f32 %v1234, %v1280
    %s1283 = sld [smem:[#allocation4 + $0x30]]
    %v1284 = vstv %s1283
    %v1285 = vmul.f32 %v984, %v1284
    %1287 = vrot.lane.b32.xlu0 %v1285, 120
    %v1288 = vpop.permute.xlu0 %1287
    %v1290 = vadd.f32 %v1242, %v1288
    %s1291 = sld [smem:[#allocation4 + $0x54]]
    %v1292 = vstv %s1291
    %v1293 = vmul.f32 %v984, %v1292
    %1295 = vrot.lane.b32.xlu0 %v1293, 120
    %v1296 = vpop.permute.xlu0 %1295
    %v1298 = vadd.f32 %v1250, %v1296
    %s1299 = sld [smem:[#allocation4 + $0x5d]]
    %v1300 = vstv %s1299
    %v1301 = vmul.f32 %v984, %v1300
    %1303 = vrot.lane.b32.xlu0 %v1301, 120
    %v1304 = vpop.permute.xlu0 %1303
    %v1306 = vadd.f32 %v1258, %v1304
    %s1307 = sld [smem:[#allocation4 + $0x66]]
    %v1308 = vstv %s1307
    %v1309 = vmul.f32 %v984, %v1308
    %1311 = vrot.lane.b32.xlu0 %v1309, 120
    %v1312 = vpop.permute.xlu0 %1311
    %v1314 = vadd.f32 %v1266, %v1312
    %s1315 = sld [smem:[#allocation4 + $0x4]]
    %v1316 = vstv %s1315
    %v1317 = vmul.f32 %v944, %v1316
    %1319 = vrot.lane.b32.xlu0 %v1317, 119
    %v1320 = vpop.permute.xlu0 %1319
    %v1322 = vadd.f32 %v1274, %v1320
    %s1323 = sld [smem:[#allocation4 + $0xd]]
    %v1324 = vstv %s1323
    %v1325 = vmul.f32 %v944, %v1324
    %1327 = vrot.lane.b32.xlu0 %v1325, 119
    %v1328 = vpop.permute.xlu0 %1327
    %v1330 = vadd.f32 %v1282, %v1328
    %s1331 = sld [smem:[#allocation4 + $0x16]]
    %v1332 = vstv %s1331
    %v1333 = vmul.f32 %v944, %v1332
    %1335 = vrot.lane.b32.xlu0 %v1333, 119
    %v1336 = vpop.permute.xlu0 %1335
    %v1338 = vadd.f32 %v1290, %v1336
    %s1339 = sld [smem:[#allocation4 + $0x3a]]
    %v1340 = vstv %s1339
    %v1341 = vmul.f32 %v944, %v1340
    %1343 = vrot.lane.b32.xlu0 %v1341, 119
    %v1344 = vpop.permute.xlu0 %1343
    %v1346 = vadd.f32 %v1298, %v1344
    %s1347 = sld [smem:[#allocation4 + $0x43]]
    %v1348 = vstv %s1347
    %v1349 = vmul.f32 %v944, %v1348
    %1351 = vrot.lane.b32.xlu0 %v1349, 119
    %v1352 = vpop.permute.xlu0 %1351
    %v1354 = vadd.f32 %v1306, %v1352
    %s1355 = sld [smem:[#allocation4 + $0x4c]]
    %v1356 = vstv %s1355
    %v1357 = vmul.f32 %v944, %v1356
    %1359 = vrot.lane.b32.xlu0 %v1357, 119
    %v1360 = vpop.permute.xlu0 %1359
    %v1362 = vadd.f32 %v1314, %v1360
    %s1363 = sld [smem:[#allocation4 + $0x1f]]
    %v1364 = vstv %s1363
    %v1365 = vmul.f32 %v984, %v1364
    %1367 = vrot.lane.b32.xlu0 %v1365, 119
    %v1368 = vpop.permute.xlu0 %1367
    %v1370 = vadd.f32 %v1322, %v1368
    %s1371 = sld [smem:[#allocation4 + $0x28]]
    %v1372 = vstv %s1371
    %v1373 = vmul.f32 %v984, %v1372
    %1375 = vrot.lane.b32.xlu0 %v1373, 119
    %v1376 = vpop.permute.xlu0 %1375
    %v1378 = vadd.f32 %v1330, %v1376
    %s1379 = sld [smem:[#allocation4 + $0x31]]
    %v1380 = vstv %s1379
    %v1381 = vmul.f32 %v984, %v1380
    %1383 = vrot.lane.b32.xlu0 %v1381, 119
    %v1384 = vpop.permute.xlu0 %1383
    %v1386 = vadd.f32 %v1338, %v1384
    %s1387 = sld [smem:[#allocation4 + $0x55]]
    %v1388 = vstv %s1387
    %v1389 = vmul.f32 %v984, %v1388
    %1391 = vrot.lane.b32.xlu0 %v1389, 119
    %v1392 = vpop.permute.xlu0 %1391
    %v1394 = vadd.f32 %v1346, %v1392
    %s1395 = sld [smem:[#allocation4 + $0x5e]]
    %v1396 = vstv %s1395
    %v1397 = vmul.f32 %v984, %v1396
    %1399 = vrot.lane.b32.xlu0 %v1397, 119
    %v1400 = vpop.permute.xlu0 %1399
    %v1402 = vadd.f32 %v1354, %v1400
    %s1403 = sld [smem:[#allocation4 + $0x67]]
    %v1404 = vstv %s1403
    %v1405 = vmul.f32 %v984, %v1404
    %1407 = vrot.lane.b32.xlu0 %v1405, 119
    %v1408 = vpop.permute.xlu0 %1407
    %v1410 = vadd.f32 %v1362, %v1408
    %s1411 = sld [smem:[#allocation4 + $0x5]]
    %v1412 = vstv %s1411
    %v1413 = vmul.f32 %v944, %v1412
    %1415 = vrot.lane.b32.xlu0 %v1413, 118
    %v1416 = vpop.permute.xlu0 %1415
    %v1418 = vadd.f32 %v1370, %v1416
    %s1419 = sld [smem:[#allocation4 + $0xe]]
    %v1420 = vstv %s1419
    %v1421 = vmul.f32 %v944, %v1420
    %1423 = vrot.lane.b32.xlu0 %v1421, 118
    %v1424 = vpop.permute.xlu0 %1423
    %v1426 = vadd.f32 %v1378, %v1424
    %s1427 = sld [smem:[#allocation4 + $0x17]]
    %v1428 = vstv %s1427
    %v1429 = vmul.f32 %v944, %v1428
    %1431 = vrot.lane.b32.xlu0 %v1429, 118
    %v1432 = vpop.permute.xlu0 %1431
    %v1434 = vadd.f32 %v1386, %v1432
    %s1435 = sld [smem:[#allocation4 + $0x3b]]
    %v1436 = vstv %s1435
    %v1437 = vmul.f32 %v944, %v1436
    %1439 = vrot.lane.b32.xlu0 %v1437, 118
    %v1440 = vpop.permute.xlu0 %1439
    %v1442 = vadd.f32 %v1394, %v1440
    %s1443 = sld [smem:[#allocation4 + $0x44]]
    %v1444 = vstv %s1443
    %v1445 = vmul.f32 %v944, %v1444
    %1447 = vrot.lane.b32.xlu0 %v1445, 118
    %v1448 = vpop.permute.xlu0 %1447
    %v1450 = vadd.f32 %v1402, %v1448
    %s1451 = sld [smem:[#allocation4 + $0x4d]]
    %v1452 = vstv %s1451
    %v1453 = vmul.f32 %v944, %v1452
    %1455 = vrot.lane.b32.xlu0 %v1453, 118
    %v1456 = vpop.permute.xlu0 %1455
    %v1458 = vadd.f32 %v1410, %v1456
    %s1459 = sld [smem:[#allocation4 + $0x20]]
    %v1460 = vstv %s1459
    %v1461 = vmul.f32 %v984, %v1460
    %1463 = vrot.lane.b32.xlu0 %v1461, 118
    %v1464 = vpop.permute.xlu0 %1463
    %v1466 = vadd.f32 %v1418, %v1464
    %s1467 = sld [smem:[#allocation4 + $0x29]]
    %v1468 = vstv %s1467
    %v1469 = vmul.f32 %v984, %v1468
    %1471 = vrot.lane.b32.xlu0 %v1469, 118
    %v1472 = vpop.permute.xlu0 %1471
    %v1474 = vadd.f32 %v1426, %v1472
    %s1475 = sld [smem:[#allocation4 + $0x32]]
    %v1476 = vstv %s1475
    %v1477 = vmul.f32 %v984, %v1476
    %1479 = vrot.lane.b32.xlu0 %v1477, 118
    %v1480 = vpop.permute.xlu0 %1479
    %v1482 = vadd.f32 %v1434, %v1480
    %s1483 = sld [smem:[#allocation4 + $0x56]]
    %v1484 = vstv %s1483
    %v1485 = vmul.f32 %v984, %v1484
    %1487 = vrot.lane.b32.xlu0 %v1485, 118
    %v1488 = vpop.permute.xlu0 %1487
    %v1490 = vadd.f32 %v1442, %v1488
    %s1491 = sld [smem:[#allocation4 + $0x5f]]
    %v1492 = vstv %s1491
    %v1493 = vmul.f32 %v984, %v1492
    %1495 = vrot.lane.b32.xlu0 %v1493, 118
    %v1496 = vpop.permute.xlu0 %1495
    %v1498 = vadd.f32 %v1450, %v1496
    %s1499 = sld [smem:[#allocation4 + $0x68]]
    %v1500 = vstv %s1499
    %v1501 = vmul.f32 %v984, %v1500
    %1503 = vrot.lane.b32.xlu0 %v1501, 118
    %v1504 = vpop.permute.xlu0 %1503
    %v1506 = vadd.f32 %v1458, %v1504
    %s1507 = sld [smem:[#allocation4 + $0x6]]
    %v1508 = vstv %s1507
    %v1509 = vmul.f32 %v944, %v1508
    %1511 = vrot.lane.b32.xlu0 %v1509, 112
    %v1512 = vpop.permute.xlu0 %1511
    %v1514 = vadd.f32 %v1466, %v1512
    %s1515 = sld [smem:[#allocation4 + $0xf]]
    %v1516 = vstv %s1515
    %v1517 = vmul.f32 %v944, %v1516
    %1519 = vrot.lane.b32.xlu0 %v1517, 112
    %v1520 = vpop.permute.xlu0 %1519
    %v1522 = vadd.f32 %v1474, %v1520
    %s1523 = sld [smem:[#allocation4 + $0x18]]
    %v1524 = vstv %s1523
    %v1525 = vmul.f32 %v944, %v1524
    %1527 = vrot.lane.b32.xlu0 %v1525, 112
    %v1528 = vpop.permute.xlu0 %1527
    %v1530 = vadd.f32 %v1482, %v1528
    %s1531 = sld [smem:[#allocation4 + $0x3c]]
    %v1532 = vstv %s1531
    %v1533 = vmul.f32 %v944, %v1532
    %1535 = vrot.lane.b32.xlu0 %v1533, 112
    %v1536 = vpop.permute.xlu0 %1535
    %v1538 = vadd.f32 %v1490, %v1536
    %s1539 = sld [smem:[#allocation4 + $0x45]]
    %v1540 = vstv %s1539
    %v1541 = vmul.f32 %v944, %v1540
    %1543 = vrot.lane.b32.xlu0 %v1541, 112
    %v1544 = vpop.permute.xlu0 %1543
    %v1546 = vadd.f32 %v1498, %v1544
    %s1547 = sld [smem:[#allocation4 + $0x4e]]
    %v1548 = vstv %s1547
    %v1549 = vmul.f32 %v944, %v1548
    %1551 = vrot.lane.b32.xlu0 %v1549, 112
    %v1552 = vpop.permute.xlu0 %1551
    %v1554 = vadd.f32 %v1506, %v1552
    %s1555 = sld [smem:[#allocation4 + $0x21]]
    %v1556 = vstv %s1555
    %v1557 = vmul.f32 %v984, %v1556
    %1559 = vrot.lane.b32.xlu0 %v1557, 112
    %v1560 = vpop.permute.xlu0 %1559
    %v1562 = vadd.f32 %v1514, %v1560
    %s1563 = sld [smem:[#allocation4 + $0x2a]]
    %v1564 = vstv %s1563
    %v1565 = vmul.f32 %v984, %v1564
    %1567 = vrot.lane.b32.xlu0 %v1565, 112
    %v1568 = vpop.permute.xlu0 %1567
    %v1570 = vadd.f32 %v1522, %v1568
    %s1571 = sld [smem:[#allocation4 + $0x33]]
    %v1572 = vstv %s1571
    %v1573 = vmul.f32 %v984, %v1572
    %1575 = vrot.lane.b32.xlu0 %v1573, 112
    %v1576 = vpop.permute.xlu0 %1575
    %v1578 = vadd.f32 %v1530, %v1576
    %s1579 = sld [smem:[#allocation4 + $0x57]]
    %v1580 = vstv %s1579
    %v1581 = vmul.f32 %v984, %v1580
    %1583 = vrot.lane.b32.xlu0 %v1581, 112
    %v1584 = vpop.permute.xlu0 %1583
    %v1586 = vadd.f32 %v1538, %v1584
    %s1587 = sld [smem:[#allocation4 + $0x60]]
    %v1588 = vstv %s1587
    %v1589 = vmul.f32 %v984, %v1588
    %1591 = vrot.lane.b32.xlu0 %v1589, 112
    %v1592 = vpop.permute.xlu0 %1591
    %v1594 = vadd.f32 %v1546, %v1592
    %s1595 = sld [smem:[#allocation4 + $0x69]]
    %v1596 = vstv %s1595
    %v1597 = vmul.f32 %v984, %v1596
    %1599 = vrot.lane.b32.xlu0 %v1597, 112
    %v1600 = vpop.permute.xlu0 %1599
    %v1602 = vadd.f32 %v1554, %v1600
    %s1603 = sld [smem:[#allocation4 + $0x7]]
    %v1604 = vstv %s1603
    %v1605 = vmul.f32 %v944, %v1604
    %1607 = vrot.lane.b32.xlu0 %v1605, 111
    %v1608 = vpop.permute.xlu0 %1607
    %v1610 = vadd.f32 %v1562, %v1608
    %s1611 = sld [smem:[#allocation4 + $0x10]]
    %v1612 = vstv %s1611
    %v1613 = vmul.f32 %v944, %v1612
    %1615 = vrot.lane.b32.xlu0 %v1613, 111
    %v1616 = vpop.permute.xlu0 %1615
    %v1618 = vadd.f32 %v1570, %v1616
    %s1619 = sld [smem:[#allocation4 + $0x19]]
    %v1620 = vstv %s1619
    %v1621 = vmul.f32 %v944, %v1620
    %1623 = vrot.lane.b32.xlu0 %v1621, 111
    %v1624 = vpop.permute.xlu0 %1623
    %v1626 = vadd.f32 %v1578, %v1624
    %s1627 = sld [smem:[#allocation4 + $0x3d]]
    %v1628 = vstv %s1627
    %v1629 = vmul.f32 %v944, %v1628
    %1631 = vrot.lane.b32.xlu0 %v1629, 111
    %v1632 = vpop.permute.xlu0 %1631
    %v1634 = vadd.f32 %v1586, %v1632
    %s1635 = sld [smem:[#allocation4 + $0x46]]
    %v1636 = vstv %s1635
    %v1637 = vmul.f32 %v944, %v1636
    %1639 = vrot.lane.b32.xlu0 %v1637, 111
    %v1640 = vpop.permute.xlu0 %1639
    %v1642 = vadd.f32 %v1594, %v1640
    %s1643 = sld [smem:[#allocation4 + $0x4f]]
    %v1644 = vstv %s1643
    %v1645 = vmul.f32 %v944, %v1644
    %1647 = vrot.lane.b32.xlu0 %v1645, 111
    %v1648 = vpop.permute.xlu0 %1647
    %v1650 = vadd.f32 %v1602, %v1648
    %s1651 = sld [smem:[#allocation4 + $0x22]]
    %v1652 = vstv %s1651
    %v1653 = vmul.f32 %v984, %v1652
    %1655 = vrot.lane.b32.xlu0 %v1653, 111
    %v1656 = vpop.permute.xlu0 %1655
    %v1658 = vadd.f32 %v1610, %v1656
    %s1659 = sld [smem:[#allocation4 + $0x2b]]
    %v1660 = vstv %s1659
    %v1661 = vmul.f32 %v984, %v1660
    %1663 = vrot.lane.b32.xlu0 %v1661, 111
    %v1664 = vpop.permute.xlu0 %1663
    %v1666 = vadd.f32 %v1618, %v1664
    %s1667 = sld [smem:[#allocation4 + $0x34]]
    %v1668 = vstv %s1667
    %v1669 = vmul.f32 %v984, %v1668
    %1671 = vrot.lane.b32.xlu0 %v1669, 111
    %v1672 = vpop.permute.xlu0 %1671
    %v1674 = vadd.f32 %v1626, %v1672
    %s1675 = sld [smem:[#allocation4 + $0x58]]
    %v1676 = vstv %s1675
    %v1677 = vmul.f32 %v984, %v1676
    %1679 = vrot.lane.b32.xlu0 %v1677, 111
    %v1680 = vpop.permute.xlu0 %1679
    %v1682 = vadd.f32 %v1634, %v1680
    %s1683 = sld [smem:[#allocation4 + $0x61]]
    %v1684 = vstv %s1683
    %v1685 = vmul.f32 %v984, %v1684
    %1687 = vrot.lane.b32.xlu0 %v1685, 111
    %v1688 = vpop.permute.xlu0 %1687
    %v1690 = vadd.f32 %v1642, %v1688
    %s1691 = sld [smem:[#allocation4 + $0x6a]]
    %v1692 = vstv %s1691
    %v1693 = vmul.f32 %v984, %v1692
    %1695 = vrot.lane.b32.xlu0 %v1693, 111
    %v1696 = vpop.permute.xlu0 %1695
    %v1698 = vadd.f32 %v1650, %v1696
    %s1699 = sld [smem:[#allocation4 + $0x8]]
    %v1700 = vstv %s1699
    %v1701 = vmul.f32 %v944, %v1700
    %1703 = vrot.lane.b32.xlu0 %v1701, 110
    %v1704 = vpop.permute.xlu0 %1703
    %v1706 = vadd.f32 %v1658, %v1704
    %s1707 = sld [smem:[#allocation4 + $0x11]]
    %v1708 = vstv %s1707
    %v1709 = vmul.f32 %v944, %v1708
    %1711 = vrot.lane.b32.xlu0 %v1709, 110
    %v1712 = vpop.permute.xlu0 %1711
    %v1714 = vadd.f32 %v1666, %v1712
    %s1715 = sld [smem:[#allocation4 + $0x1a]]
    %v1716 = vstv %s1715
    %v1717 = vmul.f32 %v944, %v1716
    %1719 = vrot.lane.b32.xlu0 %v1717, 110
    %v1720 = vpop.permute.xlu0 %1719
    %v1722 = vadd.f32 %v1674, %v1720
    %s1723 = sld [smem:[#allocation4 + $0x3e]]
    %v1724 = vstv %s1723
    %v1725 = vmul.f32 %v944, %v1724
    %1727 = vrot.lane.b32.xlu0 %v1725, 110
    %v1728 = vpop.permute.xlu0 %1727
    %v1730 = vadd.f32 %v1682, %v1728
    %s1731 = sld [smem:[#allocation4 + $0x47]]
    %v1732 = vstv %s1731
    %v1733 = vmul.f32 %v944, %v1732
    %1735 = vrot.lane.b32.xlu0 %v1733, 110
    %v1736 = vpop.permute.xlu0 %1735
    %v1738 = vadd.f32 %v1690, %v1736
    %s1739 = sld [smem:[#allocation4 + $0x50]]
    %v1740 = vstv %s1739
    %v1741 = vmul.f32 %v944, %v1740
    %1743 = vrot.lane.b32.xlu0 %v1741, 110
    %v1744 = vpop.permute.xlu0 %1743
    %v1746 = vadd.f32 %v1698, %v1744
    %s1747 = sld [smem:[#allocation4 + $0x23]]
    %v1748 = vstv %s1747
    %v1749 = vmul.f32 %v984, %v1748
    %1751 = vrot.lane.b32.xlu0 %v1749, 110
    %v1752 = vpop.permute.xlu0 %1751
    %v1754 = vadd.f32 %v1706, %v1752
    %s1755 = sld [smem:[#allocation4 + $0x2c]]
    %v1756 = vstv %s1755
    %v1757 = vmul.f32 %v984, %v1756
    %1759 = vrot.lane.b32.xlu0 %v1757, 110
    %v1760 = vpop.permute.xlu0 %1759
    %v1762 = vadd.f32 %v1714, %v1760
    %s1763 = sld [smem:[#allocation4 + $0x35]]
    %v1764 = vstv %s1763
    %v1765 = vmul.f32 %v984, %v1764
    %1767 = vrot.lane.b32.xlu0 %v1765, 110
    %v1768 = vpop.permute.xlu0 %1767
    %v1770 = vadd.f32 %v1722, %v1768
    %s1771 = sld [smem:[#allocation4 + $0x59]]
    %v1772 = vstv %s1771
    %v1773 = vmul.f32 %v984, %v1772
    %1775 = vrot.lane.b32.xlu0 %v1773, 110
    %v1776 = vpop.permute.xlu0 %1775
    %v1778 = vadd.f32 %v1730, %v1776
    %s1779 = sld [smem:[#allocation4 + $0x62]]
    %v1780 = vstv %s1779
    %v1781 = vmul.f32 %v984, %v1780
    %1783 = vrot.lane.b32.xlu0 %v1781, 110
    %v1784 = vpop.permute.xlu0 %1783
    %v1786 = vadd.f32 %v1738, %v1784
    %s1787 = sld [smem:[#allocation4 + $0x6b]]
    %v1788 = vstv %s1787
    %v1789 = vmul.f32 %v984, %v1788
    %1791 = vrot.lane.b32.xlu0 %v1789, 110
    %v1792 = vpop.permute.xlu0 %1791
    %v1794 = vadd.f32 %v1746, %v1792
    %v1796 = vrot.slane %v1762, 1
    %v1798 = vadd.f32 %v1754, %v1796
    %v1800 = vrot.slane %v1770, 2
    %v1802 = vadd.f32 %v1798, %v1800
    %v1804 = vrot.slane %v1786, 1
    %v1806 = vadd.f32 %v1778, %v1804
    %v1808 = vrot.slane %v1794, 2
    %v1810 = vadd.f32 %v1806, %v1808
    %v1811 = vld [vmem:[%s6] sm:$0xf]
    %v1812 = vmul.f32 %v1802, %v1811
    %vm1813 = vcmask 748544
    %v1814 = vsel %vm1813, %v1812, 0.0
    %1815 = vadd.xlane.f32.xlu0 %v1814
    %v1816 = vpop.xlane.xlu0 %1815
    %v1817 = vrot.slane %v1816, 4
    %v1818 = vadd.f32 %v1816, %v1817
    %v1819 = vrot.slane %v1818, 2
    %v1820 = vadd.f32 %v1818, %v1819
    %v1821 = vrot.slane %v1820, 1
    %v1822 = vadd.f32 %v1820, %v1821
    %s1823 = vtos %v1822
    %v1824 = vstv %s1823
    %v1825 = vmul.f32 %v1824, 0.0078125
    %v1826 = vmul.f32 %v1812, %v1802
    %v1827 = vsel %vm1813, %v1826, 0.0
    %1828 = vadd.xlane.f32.xlu0 %v1827
    %v1829 = vpop.xlane.xlu0 %1828
    %v1830 = vrot.slane %v1829, 4
    %v1831 = vadd.f32 %v1829, %v1830
    %v1832 = vrot.slane %v1831, 2
    %v1833 = vadd.f32 %v1831, %v1832
    %v1834 = vrot.slane %v1833, 1
    %v1835 = vadd.f32 %v1833, %v1834
    %s1836 = vtos %v1835
    %v1837 = vstv %s1836
    %v1838 = vmul.f32 %v1837, 0.0078125
    %v1839 = vmul.f32 %v1825, %v1825
    %v1840 = vsub.f32 %v1838, %v1839
    %v1841 = vadd.f32 %v1840, 1e-05
    %v1842 = vrsqrt.pop %v1841
    %v1843 = vmul.f32 %v937, %v1842
    %v1844 = vmul.f32 %v1825, %v1843
    %v1845 = vsub.f32 %v940, %v1844
    %v1846 = vmul.f32 %v1802, %v1843
    %v1847 = vadd.f32 %v1846, %v1845
    %v1848 = vmax.f32 %v1847, 0.0
    %1849 = vst.msk [vmem:[%s7] sm:$0xf] %vm1813, %v1848
    %s1850 = sld [smem:[#allocation6 + $0x1]]
    %s1851 = sld [smem:[#allocation7 + $0x1]]
    %v1852 = vmul.f32 %v1810, %v1811
    %v1853 = vsel %vm1813, %v1852, 0.0
    %1854 = vadd.xlane.f32.xlu0 %v1853
    %v1855 = vpop.xlane.xlu0 %1854
    %v1856 = vrot.slane %v1855, 4
    %v1857 = vadd.f32 %v1855, %v1856
    %v1858 = vrot.slane %v1857, 2
    %v1859 = vadd.f32 %v1857, %v1858
    %v1860 = vrot.slane %v1859, 1
    %v1861 = vadd.f32 %v1859, %v1860
    %s1862 = vtos %v1861
    %v1863 = vstv %s1862
    %v1864 = vmul.f32 %v1863, 0.0078125
    %v1865 = vmul.f32 %v1852, %v1810
    %v1866 = vsel %vm1813, %v1865, 0.0
    %1867 = vadd.xlane.f32.xlu0 %v1866
    %v1868 = vpop.xlane.xlu0 %1867
    %v1869 = vrot.slane %v1868, 4
    %v1870 = vadd.f32 %v1868, %v1869
    %v1871 = vrot.slane %v1870, 2
    %v1872 = vadd.f32 %v1870, %v1871
    %v1873 = vrot.slane %v1872, 1
    %v1874 = vadd.f32 %v1872, %v1873
    %s1875 = vtos %v1874
    %v1876 = vstv %s1875
    %v1877 = vmul.f32 %v1876, 0.0078125
    %v1878 = vmul.f32 %v1864, %v1864
    %v1879 = vsub.f32 %v1877, %v1878
    %v1880 = vadd.f32 %v1879, 1e-05
    %v1881 = vrsqrt.pop %v1880
    %v1882 = vstv %s1850
    %v1883 = vmul.f32 %v1882, %v1881
    %v1884 = vmul.f32 %v1864, %v1883
    %v1885 = vstv %s1851
    %v1886 = vsub.f32 %v1885, %v1884
    %v1887 = vmul.f32 %v1810, %v1883
    %v1888 = vadd.f32 %v1887, %v1886
    %v1889 = vmax.f32 %v1888, 0.0
    %s1890 = scalar_lea.vmem %s7, 4
    %1891 = vst.msk [vmem:[%s1890] sm:$0xf] %vm1813, %v1889
    // Predicated region
    $region46: #{forward.1} parent=1 // pred_check
      _
    $region47: #{forward.1} parent=1 // pred_check_branch
      %1893 = sbr.rel (0) target = $region49
    $region48: #{forward.1} parent=1 // pred_region
      _
    $region49: #{forward.1} parent=1 // pred_fallthru
      _
    // Predicated region
    $region50: #{forward.1} parent=1 // pred_check
      _
    $region51: #{forward.1} parent=1 // pred_check_branch
      %1895 = sbr.rel (0) target = $region53
    $region52: #{forward.1} parent=1 // pred_region
      _
    $region53: #{forward.1} parent=1 // pred_fallthru
      _
    %1896 = vsyncpa [#allocation3], 1
    %1897 = vsyncpa [#allocation5], 1
    %1898 = vsyncpa [#allocation8], 1

</llo_original>
